<compile_context>
chip_gen: v7x
topology: tpu7x:2x2x1
jax: 0.10.0
libtpu: 0.0.40
codegen_flags: <defaults>
</compile_context>

<pallas_src>
import jax
import jax.numpy as jnp
from jax import lax
from jax.experimental import pallas as pl
from jax.experimental.pallas import tpu as pltpu

INPUT_SIZE = 1
HIDDEN_SIZE = 1

LANE = 128                 # lane width
SUB = 8                    # f32 sublanes per vreg
B_SUPER = SUB * LANE       # batch elements per grid supergroup (sublane-folded)
UNROLL = 8                 # Python-unrolled inner timesteps
T_CHUNK_MAX = 256          # timesteps per grid step (keeps VMEM ~4 MiB, v5e-safe)


def _round_up(x, m):
    return (x + m - 1) // m * m


def gru_kernel(w_ih_ref, w_hh_ref, b_ih_ref, b_hh_ref, x_ref, out_ref, h_ref):
    """One (batch-supergroup, time-chunk) grid step of the GRU recurrence.

    w_*/b_* : SMEM f32[3]            (I == H == 1; PyTorch gate order r, z, n)
    x_ref   : VMEM f32[T_CHUNK, 8, 128]   (time-major, batch on sublane x lane)
    out_ref : VMEM f32[T_CHUNK, 8, 128]
    h_ref   : VMEM f32[8, 128]       persistent hidden state across time chunks
    """
    # reset h at the first time chunk of each batch supergroup
    @pl.when(pl.program_id(1) == 0)
    def _():
        h_ref[...] = jnp.zeros_like(h_ref)

    # ---- scalar weights ----------------------------------------------------
    w_ir, w_iz, w_in = w_ih_ref[0], w_ih_ref[1], w_ih_ref[2]
    w_hr, w_hz, w_hn = w_hh_ref[0], w_hh_ref[1], w_hh_ref[2]
    b_ir, b_iz, b_in = b_ih_ref[0], b_ih_ref[1], b_ih_ref[2]
    b_hr, b_hz, b_hn = b_hh_ref[0], b_hh_ref[1], b_hh_ref[2]

    # sigmoid(a) == 0.5 * tanh(0.5 * a) + 0.5  -> one EUP op on the chain;
    # fold the 0.5 into the scalar coefficients once (scalar unit, free).
    c_ir, c_br, c_hr = 0.5 * w_ir, 0.5 * (b_ir + b_hr), 0.5 * w_hr
    c_iz, c_bz, c_hz = 0.5 * w_iz, 0.5 * (b_iz + b_hz), 0.5 * w_hz

    t_chunk = x_ref.shape[0]
    n_groups = t_chunk // UNROLL  # t_chunk is a multiple of UNROLL by construction

    def group(c, h):
        base = pl.multiple_of(c * UNROLL, UNROLL)
        xs = x_ref[pl.ds(base, UNROLL)]          # (UNROLL, 8, 128) bulk load
        # Unrolled by 8: only the h -> h dependency is serial; the scheduler
        # interleaves adjacent steps' x-projection (VPU) with the EUP chain.
        for i in range(UNROLL):
            x = xs[i]                             # (8, 128) full vreg
            r = 0.5 + 0.5 * jnp.tanh(x * c_ir + c_br + h * c_hr)   # sigmoid
            z = 0.5 + 0.5 * jnp.tanh(x * c_iz + c_bz + h * c_hz)   # sigmoid
            n = jnp.tanh(x * w_in + b_in + r * (h * w_hn + b_hn))
            h = n + z * (h - n)                   # == (1 - z) * n + z * h
            out_ref[base + i] = h                 # full unmasked (8,128) store
        return h

    h = lax.fori_loop(0, n_groups, group, h_ref[...], unroll=2)
    h_ref[...] = h


def gru_counter_forward(x, params, t_chunk_max=T_CHUNK_MAX):
    """x: (B, T, 1) batch_first float32.  Returns (B, T, 1), matching
    nn.GRU(1, 1, batch_first=True)(x, h0=0)[0]."""
    w_ih, w_hh, b_ih, b_hh = params
    B, T, I = x.shape
    assert I == INPUT_SIZE

    # ---- layout: batch folded onto (supergroup, sublane, lane) -------------
    b_pad = _round_up(B, B_SUPER)
    n_sg = b_pad // B_SUPER
    t_chunk = min(t_chunk_max, _round_up(T, UNROLL))
    t_pad = _round_up(T, t_chunk)
    n_tc = t_pad // t_chunk

    x_bt = x[..., 0].astype(jnp.float32)                      # (B, T)
    x_p = jnp.pad(x_bt, ((0, b_pad - B), (0, t_pad - T)))     # (b_pad, t_pad)
    # (n_sg, 8, 128, t_pad) -> (n_sg, t_pad, 8, 128): time-major with the batch
    # spread over sublane x lane, so each timestep is one full (8,128) vreg.
    x_r = x_p.reshape(n_sg, SUB, LANE, t_pad).transpose(0, 3, 1, 2)

    smem = pl.BlockSpec(memory_space=pltpu.MemorySpace.SMEM)
    grid_spec = pltpu.PrefetchScalarGridSpec(
        num_scalar_prefetch=0,
        grid=(n_sg, n_tc),  # (parallel batch supergroups, serial time chunks)
        in_specs=[smem, smem, smem, smem,
                  pl.BlockSpec((None, t_chunk, SUB, LANE),
                               lambda g, tc: (g, tc, 0, 0))],
        out_specs=pl.BlockSpec((None, t_chunk, SUB, LANE),
                               lambda g, tc: (g, tc, 0, 0)),
        scratch_shapes=[pltpu.VMEM((SUB, LANE), jnp.float32)],  # persistent h
    )

    out_r = pl.pallas_call(
        gru_kernel,
        out_shape=jax.ShapeDtypeStruct((n_sg, t_pad, SUB, LANE), jnp.float32),
        grid_spec=grid_spec,
        compiler_params=pltpu.CompilerParams(
            dimension_semantics=("parallel", "arbitrary")),
    )(
        w_ih.reshape(-1).astype(jnp.float32),  # (3,) from (3*H, I) = (3, 1)
        w_hh.reshape(-1).astype(jnp.float32),  # (3,) from (3*H, H) = (3, 1)
        b_ih.astype(jnp.float32),              # (3,)
        b_hh.astype(jnp.float32),              # (3,)
        x_r,
    )

    # undo layout + padding: (n_sg, t_pad, 8, 128) -> (B, T, 1)
    out = out_r.transpose(0, 2, 3, 1).reshape(b_pad, t_pad)[:B, :T]
    return out[..., None]


def gru_reference(x, params):
    """Pure-JAX reference (lax.scan) mirroring PyTorch nn.GRU semantics."""
    w_ih, w_hh, b_ih, b_hh = params
    B = x.shape[0]
    x_tm = jnp.transpose(x, (1, 0, 2))  # (T, B, 1)

    def cell(h, x_t):
        gi = x_t @ w_ih.T + b_ih  # (B, 3H)
        gh = h @ w_hh.T + b_hh    # (B, 3H)
        H = HIDDEN_SIZE
        r = jax.nn.sigmoid(gi[:, 0:H] + gh[:, 0:H])
        z = jax.nn.sigmoid(gi[:, H:2 * H] + gh[:, H:2 * H])
        n = jnp.tanh(gi[:, 2 * H:3 * H] + r * gh[:, 2 * H:3 * H])
        h_new = (1.0 - z) * n + z * h
        return h_new, h_new

    h0 = jnp.zeros((B, HIDDEN_SIZE), jnp.float32)
    _, out_tm = lax.scan(cell, h0, x_tm)
    return jnp.transpose(out_tm, (1, 0, 2))


def init_params(key):
    """Deterministic init matching nn.GRU shapes: uniform(-1/sqrt(H), 1/sqrt(H))."""
    k1, k2, k3, k4 = jax.random.split(key, 4)
    bound = 1.0 / jnp.sqrt(jnp.float32(HIDDEN_SIZE))
    w_ih = jax.random.uniform(k1, (3 * HIDDEN_SIZE, INPUT_SIZE), jnp.float32, -bound, bound)
    w_hh = jax.random.uniform(k2, (3 * HIDDEN_SIZE, HIDDEN_SIZE), jnp.float32, -bound, bound)
    b_ih = jax.random.uniform(k3, (3 * HIDDEN_SIZE,), jnp.float32, -bound, bound)
    b_hh = jax.random.uniform(k4, (3 * HIDDEN_SIZE,), jnp.float32, -bound, bound)
    return w_ih, w_hh, b_ih, b_hh


if __name__ == "__main__":
    key = jax.random.PRNGKey(0)
    k_param, k_x1, k_x2 = jax.random.split(key, 3)
    params = init_params(k_param)

    # 1) tiny shapes: exercises T-padding (12 -> 16) and batch padding (4 -> 1024)
    batch_size, seq_len = 4, 12
    x = jax.random.normal(k_x1, (batch_size, seq_len, INPUT_SIZE), dtype=jnp.float32)
    out = jax.block_until_ready(gru_counter_forward(x, params))
    ref = jax.block_until_ready(gru_reference(x, params))
    assert out.shape == (batch_size, seq_len, HIDDEN_SIZE)
    assert jnp.allclose(out, ref, rtol=1e-3, atol=1e-3), "mismatch vs reference GRU (small)"

    # 2) exercises the multi-time-chunk h carry (T=300 -> 2 chunks of 256) and
    #    multiple batch supergroups (B=1030 -> 2 parallel grid rows)
    batch_size2, seq_len2 = 1030, 300
    x2 = jax.random.normal(k_x2, (batch_size2, seq_len2, INPUT_SIZE), dtype=jnp.float32)
    out2 = jax.block_until_ready(gru_counter_forward(x2, params))
    ref2 = jax.block_until_ready(gru_reference(x2, params))
    assert out2.shape == (batch_size2, seq_len2, HIDDEN_SIZE)
    assert jnp.allclose(out2, ref2, rtol=1e-3, atol=1e-3), "mismatch vs reference GRU (chunked)"

    print("KERNEL_OK")
</pallas_src>

<mosaic_0001>
module attributes {stable_mosaic.version = 11 : i64} {
  func.func @gru_kernel(%arg0: i32, %arg1: i32, %arg2: memref<3xf32, #tpu.memory_space<smem>>, %arg3: memref<3xf32, #tpu.memory_space<smem>>, %arg4: memref<3xf32, #tpu.memory_space<smem>>, %arg5: memref<3xf32, #tpu.memory_space<smem>>, %arg6: memref<1x16x8x128xf32, #tpu.memory_space<vmem>>, %arg7: memref<1x16x8x128xf32, #tpu.memory_space<vmem>>, %arg8: memref<8x128xf32, #tpu.memory_space<vmem>>) attributes {dimension_semantics = [#tpu.dimension_semantics<parallel>, #tpu.dimension_semantics<arbitrary>], iteration_bounds = array<i64: 1, 1>, scalar_prefetch = 0 : i64, scratch_operands = 1 : i64, tpu.core_type = #tpu.core_type<tc>, window_params = [{transform_indices = @transform_0, window_bounds = array<i64: 3>}, {transform_indices = @transform_1, window_bounds = array<i64: 3>}, {transform_indices = @transform_2, window_bounds = array<i64: 3>}, {transform_indices = @transform_3, window_bounds = array<i64: 3>}, {transform_indices = @transform_4, window_bounds = array<i64: 1, 16, 8, 128>}, {transform_indices = @transform_5, window_bounds = array<i64: 1, 16, 8, 128>}]} {
    %c0_i32 = arith.constant 0 : i32
    %0 = arith.cmpi eq, %arg1, %c0_i32 : i32
    %1 = arith.extui %0 : i1 to i32
    %c0_i32_0 = arith.constant 0 : i32
    %2 = arith.cmpi ne, %1, %c0_i32_0 : i32
    scf.if %2 {
      %cst_150 = arith.constant 0.000000e+00 : f32
      %755 = vector.broadcast %cst_150 : f32 to vector<8x128xf32>
      %c0_151 = arith.constant 0 : index
      %c0_152 = arith.constant 0 : index
      %756 = vector.load %arg8[%c0_151, %c0_152] : memref<8x128xf32, #tpu.memory_space<vmem>>, vector<8x128xf32>
      tpu.vector_store %arg8[%c0_151, %c0_152], %755 {strides = array<i32>} : memref<8x128xf32, #tpu.memory_space<vmem>>, vector<8x128xf32>,
    } else {
    }
    %c0 = arith.constant 0 : index
    %3 = memref.load %arg2[%c0] : memref<3xf32, #tpu.memory_space<smem>>
    %c1 = arith.constant 1 : index
    %4 = memref.load %arg2[%c1] : memref<3xf32, #tpu.memory_space<smem>>
    %c2 = arith.constant 2 : index
    %5 = memref.load %arg2[%c2] : memref<3xf32, #tpu.memory_space<smem>>
    %c0_1 = arith.constant 0 : index
    %6 = memref.load %arg3[%c0_1] : memref<3xf32, #tpu.memory_space<smem>>
    %c1_2 = arith.constant 1 : index
    %7 = memref.load %arg3[%c1_2] : memref<3xf32, #tpu.memory_space<smem>>
    %c2_3 = arith.constant 2 : index
    %8 = memref.load %arg3[%c2_3] : memref<3xf32, #tpu.memory_space<smem>>
    %c0_4 = arith.constant 0 : index
    %9 = memref.load %arg4[%c0_4] : memref<3xf32, #tpu.memory_space<smem>>
    %c1_5 = arith.constant 1 : index
    %10 = memref.load %arg4[%c1_5] : memref<3xf32, #tpu.memory_space<smem>>
    %c2_6 = arith.constant 2 : index
    %11 = memref.load %arg4[%c2_6] : memref<3xf32, #tpu.memory_space<smem>>
    %c0_7 = arith.constant 0 : index
    %12 = memref.load %arg5[%c0_7] : memref<3xf32, #tpu.memory_space<smem>>
    %c1_8 = arith.constant 1 : index
    %13 = memref.load %arg5[%c1_8] : memref<3xf32, #tpu.memory_space<smem>>
    %c2_9 = arith.constant 2 : index
    %14 = memref.load %arg5[%c2_9] : memref<3xf32, #tpu.memory_space<smem>>
    %cst = arith.constant 5.000000e-01 : f32
    %15 = arith.mulf %cst, %3 : f32
    %16 = arith.addf %9, %12 : f32
    %cst_10 = arith.constant 5.000000e-01 : f32
    %17 = arith.mulf %cst_10, %16 : f32
    %cst_11 = arith.constant 5.000000e-01 : f32
    %18 = arith.mulf %cst_11, %6 : f32
    %cst_12 = arith.constant 5.000000e-01 : f32
    %19 = arith.mulf %cst_12, %4 : f32
    %20 = arith.addf %10, %13 : f32
    %cst_13 = arith.constant 5.000000e-01 : f32
    %21 = arith.mulf %cst_13, %20 : f32
    %cst_14 = arith.constant 5.000000e-01 : f32
    %22 = arith.mulf %cst_14, %7 : f32
    %c0_15 = arith.constant 0 : index
    %c0_16 = arith.constant 0 : index
    %23 = vector.load %arg8[%c0_15, %c0_16] : memref<8x128xf32, #tpu.memory_space<vmem>>, vector<8x128xf32>
    %c0_i32_17 = arith.constant 0 : i32
    %c8_i32 = arith.constant 8 : i32
    %24 = arith.muli %c0_i32_17, %c8_i32 : i32
    %25 = tpu.assume_multiple %24, 8 : i32
    %c0_18 = arith.constant 0 : index
    %26 = arith.index_cast %25 : i32 to index
    %c0_19 = arith.constant 0 : index
    %c0_20 = arith.constant 0 : index
    %27 = vector.load %arg6[%c0_18, %26, %c0_19, %c0_20] : memref<1x16x8x128xf32, #tpu.memory_space<vmem>>, vector<1x8x8x128xf32>
    %28 = vector.shape_cast %27 : vector<1x8x8x128xf32> to vector<8x8x128xf32>
    %29 = vector.extract_strided_slice %28 {offsets = [0, 0, 0], sizes = [1, 8, 128], strides = [1, 1, 1]} : vector<8x8x128xf32> to vector<1x8x128xf32>
    %30 = vector.shape_cast %29 : vector<1x8x128xf32> to vector<8x128xf32>
    %31 = vector.broadcast %15 : f32 to vector<8x128xf32>
    %32 = arith.mulf %30, %31 : vector<8x128xf32>
    %33 = vector.broadcast %17 : f32 to vector<8x128xf32>
    %34 = arith.addf %32, %33 : vector<8x128xf32>
    %35 = vector.broadcast %18 : f32 to vector<8x128xf32>
    %36 = arith.mulf %23, %35 : vector<8x128xf32>
    %37 = arith.addf %34, %36 : vector<8x128xf32>
    %38 = math.tanh %37 : vector<8x128xf32>
    %cst_21 = arith.constant 5.000000e-01 : f32
    %39 = vector.broadcast %cst_21 : f32 to vector<8x128xf32>
    %40 = arith.mulf %39, %38 : vector<8x128xf32>
    %cst_22 = arith.constant 5.000000e-01 : f32
    %41 = vector.broadcast %cst_22 : f32 to vector<8x128xf32>
    %42 = arith.addf %41, %40 : vector<8x128xf32>
    %43 = vector.broadcast %19 : f32 to vector<8x128xf32>
    %44 = arith.mulf %30, %43 : vector<8x128xf32>
    %45 = vector.broadcast %21 : f32 to vector<8x128xf32>
    %46 = arith.addf %44, %45 : vector<8x128xf32>
    %47 = vector.broadcast %22 : f32 to vector<8x128xf32>
    %48 = arith.mulf %23, %47 : vector<8x128xf32>
    %49 = arith.addf %46, %48 : vector<8x128xf32>
    %50 = math.tanh %49 : vector<8x128xf32>
    %cst_23 = arith.constant 5.000000e-01 : f32
    %51 = vector.broadcast %cst_23 : f32 to vector<8x128xf32>
    %52 = arith.mulf %51, %50 : vector<8x128xf32>
    %cst_24 = arith.constant 5.000000e-01 : f32
    %53 = vector.broadcast %cst_24 : f32 to vector<8x128xf32>
    %54 = arith.addf %53, %52 : vector<8x128xf32>
    %55 = vector.broadcast %5 : f32 to vector<8x128xf32>
    %56 = arith.mulf %30, %55 : vector<8x128xf32>
    %57 = vector.broadcast %11 : f32 to vector<8x128xf32>
    %58 = arith.addf %56, %57 : vector<8x128xf32>
    %59 = vector.broadcast %8 : f32 to vector<8x128xf32>
    %60 = arith.mulf %23, %59 : vector<8x128xf32>
    %61 = vector.broadcast %14 : f32 to vector<8x128xf32>
    %62 = arith.addf %60, %61 : vector<8x128xf32>
    %63 = arith.mulf %42, %62 : vector<8x128xf32>
    %64 = arith.addf %58, %63 : vector<8x128xf32>
    %65 = math.tanh %64 : vector<8x128xf32>
    %66 = arith.subf %23, %65 : vector<8x128xf32>
    %67 = arith.mulf %54, %66 : vector<8x128xf32>
    %68 = arith.addf %65, %67 : vector<8x128xf32>
    %c0_i32_25 = arith.constant 0 : i32
    %69 = arith.addi %25, %c0_i32_25 : i32
    %c0_26 = arith.constant 0 : index
    %70 = arith.index_cast %69 : i32 to index
    %c0_27 = arith.constant 0 : index
    %c0_28 = arith.constant 0 : index
    %71 = vector.load %arg7[%c0_26, %70, %c0_27, %c0_28] : memref<1x16x8x128xf32, #tpu.memory_space<vmem>>, vector<1x1x8x128xf32>
    %72 = vector.shape_cast %71 : vector<1x1x8x128xf32> to vector<8x128xf32>
    %73 = vector.shape_cast %68 : vector<8x128xf32> to vector<1x1x8x128xf32>
    tpu.vector_store %arg7[%c0_26, %70, %c0_27, %c0_28], %73 {strides = array<i32>} : memref<1x16x8x128xf32, #tpu.memory_space<vmem>>, vector<1x1x8x128xf32>,
    %74 = vector.extract_strided_slice %28 {offsets = [1, 0, 0], sizes = [1, 8, 128], strides = [1, 1, 1]} : vector<8x8x128xf32> to vector<1x8x128xf32>
    %75 = vector.shape_cast %74 : vector<1x8x128xf32> to vector<8x128xf32>
    %76 = vector.broadcast %15 : f32 to vector<8x128xf32>
    %77 = arith.mulf %75, %76 : vector<8x128xf32>
    %78 = vector.broadcast %17 : f32 to vector<8x128xf32>
    %79 = arith.addf %77, %78 : vector<8x128xf32>
    %80 = vector.broadcast %18 : f32 to vector<8x128xf32>
    %81 = arith.mulf %68, %80 : vector<8x128xf32>
    %82 = arith.addf %79, %81 : vector<8x128xf32>
    %83 = math.tanh %82 : vector<8x128xf32>
    %cst_29 = arith.constant 5.000000e-01 : f32
    %84 = vector.broadcast %cst_29 : f32 to vector<8x128xf32>
    %85 = arith.mulf %84, %83 : vector<8x128xf32>
    %cst_30 = arith.constant 5.000000e-01 : f32
    %86 = vector.broadcast %cst_30 : f32 to vector<8x128xf32>
    %87 = arith.addf %86, %85 : vector<8x128xf32>
    %88 = vector.broadcast %19 : f32 to vector<8x128xf32>
    %89 = arith.mulf %75, %88 : vector<8x128xf32>
    %90 = vector.broadcast %21 : f32 to vector<8x128xf32>
    %91 = arith.addf %89, %90 : vector<8x128xf32>
    %92 = vector.broadcast %22 : f32 to vector<8x128xf32>
    %93 = arith.mulf %68, %92 : vector<8x128xf32>
    %94 = arith.addf %91, %93 : vector<8x128xf32>
    %95 = math.tanh %94 : vector<8x128xf32>
    %cst_31 = arith.constant 5.000000e-01 : f32
    %96 = vector.broadcast %cst_31 : f32 to vector<8x128xf32>
    %97 = arith.mulf %96, %95 : vector<8x128xf32>
    %cst_32 = arith.constant 5.000000e-01 : f32
    %98 = vector.broadcast %cst_32 : f32 to vector<8x128xf32>
    %99 = arith.addf %98, %97 : vector<8x128xf32>
    %100 = vector.broadcast %5 : f32 to vector<8x128xf32>
    %101 = arith.mulf %75, %100 : vector<8x128xf32>
    %102 = vector.broadcast %11 : f32 to vector<8x128xf32>
    %103 = arith.addf %101, %102 : vector<8x128xf32>
    %104 = vector.broadcast %8 : f32 to vector<8x128xf32>
    %105 = arith.mulf %68, %104 : vector<8x128xf32>
    %106 = vector.broadcast %14 : f32 to vector<8x128xf32>
    %107 = arith.addf %105, %106 : vector<8x128xf32>
    %108 = arith.mulf %87, %107 : vector<8x128xf32>
    %109 = arith.addf %103, %108 : vector<8x128xf32>
    %110 = math.tanh %109 : vector<8x128xf32>
    %111 = arith.subf %68, %110 : vector<8x128xf32>
    %112 = arith.mulf %99, %111 : vector<8x128xf32>
    %113 = arith.addf %110, %112 : vector<8x128xf32>
    %c1_i32 = arith.constant 1 : i32
    %114 = arith.addi %25, %c1_i32 : i32
    %c0_33 = arith.constant 0 : index
    %115 = arith.index_cast %114 : i32 to index
    %c0_34 = arith.constant 0 : index
    %c0_35 = arith.constant 0 : index
    %116 = vector.load %arg7[%c0_33, %115, %c0_34, %c0_35] : memref<1x16x8x128xf32, #tpu.memory_space<vmem>>, vector<1x1x8x128xf32>
    %117 = vector.shape_cast %116 : vector<1x1x8x128xf32> to vector<8x128xf32>
    %118 = vector.shape_cast %113 : vector<8x128xf32> to vector<1x1x8x128xf32>
    tpu.vector_store %arg7[%c0_33, %115, %c0_34, %c0_35], %118 {strides = array<i32>} : memref<1x16x8x128xf32, #tpu.memory_space<vmem>>, vector<1x1x8x128xf32>,
    %119 = vector.extract_strided_slice %28 {offsets = [2, 0, 0], sizes = [1, 8, 128], strides = [1, 1, 1]} : vector<8x8x128xf32> to vector<1x8x128xf32>
    %120 = vector.shape_cast %119 : vector<1x8x128xf32> to vector<8x128xf32>
    %121 = vector.broadcast %15 : f32 to vector<8x128xf32>
    %122 = arith.mulf %120, %121 : vector<8x128xf32>
    %123 = vector.broadcast %17 : f32 to vector<8x128xf32>
    %124 = arith.addf %122, %123 : vector<8x128xf32>
    %125 = vector.broadcast %18 : f32 to vector<8x128xf32>
    %126 = arith.mulf %113, %125 : vector<8x128xf32>
    %127 = arith.addf %124, %126 : vector<8x128xf32>
    %128 = math.tanh %127 : vector<8x128xf32>
    %cst_36 = arith.constant 5.000000e-01 : f32
    %129 = vector.broadcast %cst_36 : f32 to vector<8x128xf32>
    %130 = arith.mulf %129, %128 : vector<8x128xf32>
    %cst_37 = arith.constant 5.000000e-01 : f32
    %131 = vector.broadcast %cst_37 : f32 to vector<8x128xf32>
    %132 = arith.addf %131, %130 : vector<8x128xf32>
    %133 = vector.broadcast %19 : f32 to vector<8x128xf32>
    %134 = arith.mulf %120, %133 : vector<8x128xf32>
    %135 = vector.broadcast %21 : f32 to vector<8x128xf32>
    %136 = arith.addf %134, %135 : vector<8x128xf32>
    %137 = vector.broadcast %22 : f32 to vector<8x128xf32>
    %138 = arith.mulf %113, %137 : vector<8x128xf32>
    %139 = arith.addf %136, %138 : vector<8x128xf32>
    %140 = math.tanh %139 : vector<8x128xf32>
    %cst_38 = arith.constant 5.000000e-01 : f32
    %141 = vector.broadcast %cst_38 : f32 to vector<8x128xf32>
    %142 = arith.mulf %141, %140 : vector<8x128xf32>
    %cst_39 = arith.constant 5.000000e-01 : f32
    %143 = vector.broadcast %cst_39 : f32 to vector<8x128xf32>
    %144 = arith.addf %143, %142 : vector<8x128xf32>
    %145 = vector.broadcast %5 : f32 to vector<8x128xf32>
    %146 = arith.mulf %120, %145 : vector<8x128xf32>
    %147 = vector.broadcast %11 : f32 to vector<8x128xf32>
    %148 = arith.addf %146, %147 : vector<8x128xf32>
    %149 = vector.broadcast %8 : f32 to vector<8x128xf32>
    %150 = arith.mulf %113, %149 : vector<8x128xf32>
    %151 = vector.broadcast %14 : f32 to vector<8x128xf32>
    %152 = arith.addf %150, %151 : vector<8x128xf32>
    %153 = arith.mulf %132, %152 : vector<8x128xf32>
    %154 = arith.addf %148, %153 : vector<8x128xf32>
    %155 = math.tanh %154 : vector<8x128xf32>
    %156 = arith.subf %113, %155 : vector<8x128xf32>
    %157 = arith.mulf %144, %156 : vector<8x128xf32>
    %158 = arith.addf %155, %157 : vector<8x128xf32>
    %c2_i32 = arith.constant 2 : i32
    %159 = arith.addi %25, %c2_i32 : i32
    %c0_40 = arith.constant 0 : index
    %160 = arith.index_cast %159 : i32 to index
    %c0_41 = arith.constant 0 : index
    %c0_42 = arith.constant 0 : index
    %161 = vector.load %arg7[%c0_40, %160, %c0_41, %c0_42] : memref<1x16x8x128xf32, #tpu.memory_space<vmem>>, vector<1x1x8x128xf32>
    %162 = vector.shape_cast %161 : vector<1x1x8x128xf32> to vector<8x128xf32>
    %163 = vector.shape_cast %158 : vector<8x128xf32> to vector<1x1x8x128xf32>
    tpu.vector_store %arg7[%c0_40, %160, %c0_41, %c0_42], %163 {strides = array<i32>} : memref<1x16x8x128xf32, #tpu.memory_space<vmem>>, vector<1x1x8x128xf32>,
    %164 = vector.extract_strided_slice %28 {offsets = [3, 0, 0], sizes = [1, 8, 128], strides = [1, 1, 1]} : vector<8x8x128xf32> to vector<1x8x128xf32>
    %165 = vector.shape_cast %164 : vector<1x8x128xf32> to vector<8x128xf32>
    %166 = vector.broadcast %15 : f32 to vector<8x128xf32>
    %167 = arith.mulf %165, %166 : vector<8x128xf32>
    %168 = vector.broadcast %17 : f32 to vector<8x128xf32>
    %169 = arith.addf %167, %168 : vector<8x128xf32>
    %170 = vector.broadcast %18 : f32 to vector<8x128xf32>
    %171 = arith.mulf %158, %170 : vector<8x128xf32>
    %172 = arith.addf %169, %171 : vector<8x128xf32>
    %173 = math.tanh %172 : vector<8x128xf32>
    %cst_43 = arith.constant 5.000000e-01 : f32
    %174 = vector.broadcast %cst_43 : f32 to vector<8x128xf32>
    %175 = arith.mulf %174, %173 : vector<8x128xf32>
    %cst_44 = arith.constant 5.000000e-01 : f32
    %176 = vector.broadcast %cst_44 : f32 to vector<8x128xf32>
    %177 = arith.addf %176, %175 : vector<8x128xf32>
    %178 = vector.broadcast %19 : f32 to vector<8x128xf32>
    %179 = arith.mulf %165, %178 : vector<8x128xf32>
    %180 = vector.broadcast %21 : f32 to vector<8x128xf32>
    %181 = arith.addf %179, %180 : vector<8x128xf32>
    %182 = vector.broadcast %22 : f32 to vector<8x128xf32>
    %183 = arith.mulf %158, %182 : vector<8x128xf32>
    %184 = arith.addf %181, %183 : vector<8x128xf32>
    %185 = math.tanh %184 : vector<8x128xf32>
    %cst_45 = arith.constant 5.000000e-01 : f32
    %186 = vector.broadcast %cst_45 : f32 to vector<8x128xf32>
    %187 = arith.mulf %186, %185 : vector<8x128xf32>
    %cst_46 = arith.constant 5.000000e-01 : f32
    %188 = vector.broadcast %cst_46 : f32 to vector<8x128xf32>
    %189 = arith.addf %188, %187 : vector<8x128xf32>
    %190 = vector.broadcast %5 : f32 to vector<8x128xf32>
    %191 = arith.mulf %165, %190 : vector<8x128xf32>
    %192 = vector.broadcast %11 : f32 to vector<8x128xf32>
    %193 = arith.addf %191, %192 : vector<8x128xf32>
    %194 = vector.broadcast %8 : f32 to vector<8x128xf32>
    %195 = arith.mulf %158, %194 : vector<8x128xf32>
    %196 = vector.broadcast %14 : f32 to vector<8x128xf32>
    %197 = arith.addf %195, %196 : vector<8x128xf32>
    %198 = arith.mulf %177, %197 : vector<8x128xf32>
    %199 = arith.addf %193, %198 : vector<8x128xf32>
    %200 = math.tanh %199 : vector<8x128xf32>
    %201 = arith.subf %158, %200 : vector<8x128xf32>
    %202 = arith.mulf %189, %201 : vector<8x128xf32>
    %203 = arith.addf %200, %202 : vector<8x128xf32>
    %c3_i32 = arith.constant 3 : i32
    %204 = arith.addi %25, %c3_i32 : i32
    %c0_47 = arith.constant 0 : index
    %205 = arith.index_cast %204 : i32 to index
    %c0_48 = arith.constant 0 : index
    %c0_49 = arith.constant 0 : index
    %206 = vector.load %arg7[%c0_47, %205, %c0_48, %c0_49] : memref<1x16x8x128xf32, #tpu.memory_space<vmem>>, vector<1x1x8x128xf32>
    %207 = vector.shape_cast %206 : vector<1x1x8x128xf32> to vector<8x128xf32>
    %208 = vector.shape_cast %203 : vector<8x128xf32> to vector<1x1x8x128xf32>
    tpu.vector_store %arg7[%c0_47, %205, %c0_48, %c0_49], %208 {strides = array<i32>} : memref<1x16x8x128xf32, #tpu.memory_space<vmem>>, vector<1x1x8x128xf32>,
    %209 = vector.extract_strided_slice %28 {offsets = [4, 0, 0], sizes = [1, 8, 128], strides = [1, 1, 1]} : vector<8x8x128xf32> to vector<1x8x128xf32>
    %210 = vector.shape_cast %209 : vector<1x8x128xf32> to vector<8x128xf32>
    %211 = vector.broadcast %15 : f32 to vector<8x128xf32>
    %212 = arith.mulf %210, %211 : vector<8x128xf32>
    %213 = vector.broadcast %17 : f32 to vector<8x128xf32>
    %214 = arith.addf %212, %213 : vector<8x128xf32>
    %215 = vector.broadcast %18 : f32 to vector<8x128xf32>
    %216 = arith.mulf %203, %215 : vector<8x128xf32>
    %217 = arith.addf %214, %216 : vector<8x128xf32>
    %218 = math.tanh %217 : vector<8x128xf32>
    %cst_50 = arith.constant 5.000000e-01 : f32
    %219 = vector.broadcast %cst_50 : f32 to vector<8x128xf32>
    %220 = arith.mulf %219, %218 : vector<8x128xf32>
    %cst_51 = arith.constant 5.000000e-01 : f32
    %221 = vector.broadcast %cst_51 : f32 to vector<8x128xf32>
    %222 = arith.addf %221, %220 : vector<8x128xf32>
    %223 = vector.broadcast %19 : f32 to vector<8x128xf32>
    %224 = arith.mulf %210, %223 : vector<8x128xf32>
    %225 = vector.broadcast %21 : f32 to vector<8x128xf32>
    %226 = arith.addf %224, %225 : vector<8x128xf32>
    %227 = vector.broadcast %22 : f32 to vector<8x128xf32>
    %228 = arith.mulf %203, %227 : vector<8x128xf32>
    %229 = arith.addf %226, %228 : vector<8x128xf32>
    %230 = math.tanh %229 : vector<8x128xf32>
    %cst_52 = arith.constant 5.000000e-01 : f32
    %231 = vector.broadcast %cst_52 : f32 to vector<8x128xf32>
    %232 = arith.mulf %231, %230 : vector<8x128xf32>
    %cst_53 = arith.constant 5.000000e-01 : f32
    %233 = vector.broadcast %cst_53 : f32 to vector<8x128xf32>
    %234 = arith.addf %233, %232 : vector<8x128xf32>
    %235 = vector.broadcast %5 : f32 to vector<8x128xf32>
    %236 = arith.mulf %210, %235 : vector<8x128xf32>
    %237 = vector.broadcast %11 : f32 to vector<8x128xf32>
    %238 = arith.addf %236, %237 : vector<8x128xf32>
    %239 = vector.broadcast %8 : f32 to vector<8x128xf32>
    %240 = arith.mulf %203, %239 : vector<8x128xf32>
    %241 = vector.broadcast %14 : f32 to vector<8x128xf32>
    %242 = arith.addf %240, %241 : vector<8x128xf32>
    %243 = arith.mulf %222, %242 : vector<8x128xf32>
    %244 = arith.addf %238, %243 : vector<8x128xf32>
    %245 = math.tanh %244 : vector<8x128xf32>
    %246 = arith.subf %203, %245 : vector<8x128xf32>
    %247 = arith.mulf %234, %246 : vector<8x128xf32>
    %248 = arith.addf %245, %247 : vector<8x128xf32>
    %c4_i32 = arith.constant 4 : i32
    %249 = arith.addi %25, %c4_i32 : i32
    %c0_54 = arith.constant 0 : index
    %250 = arith.index_cast %249 : i32 to index
    %c0_55 = arith.constant 0 : index
    %c0_56 = arith.constant 0 : index
    %251 = vector.load %arg7[%c0_54, %250, %c0_55, %c0_56] : memref<1x16x8x128xf32, #tpu.memory_space<vmem>>, vector<1x1x8x128xf32>
    %252 = vector.shape_cast %251 : vector<1x1x8x128xf32> to vector<8x128xf32>
    %253 = vector.shape_cast %248 : vector<8x128xf32> to vector<1x1x8x128xf32>
    tpu.vector_store %arg7[%c0_54, %250, %c0_55, %c0_56], %253 {strides = array<i32>} : memref<1x16x8x128xf32, #tpu.memory_space<vmem>>, vector<1x1x8x128xf32>,
    %254 = vector.extract_strided_slice %28 {offsets = [5, 0, 0], sizes = [1, 8, 128], strides = [1, 1, 1]} : vector<8x8x128xf32> to vector<1x8x128xf32>
    %255 = vector.shape_cast %254 : vector<1x8x128xf32> to vector<8x128xf32>
    %256 = vector.broadcast %15 : f32 to vector<8x128xf32>
    %257 = arith.mulf %255, %256 : vector<8x128xf32>
    %258 = vector.broadcast %17 : f32 to vector<8x128xf32>
    %259 = arith.addf %257, %258 : vector<8x128xf32>
    %260 = vector.broadcast %18 : f32 to vector<8x128xf32>
    %261 = arith.mulf %248, %260 : vector<8x128xf32>
    %262 = arith.addf %259, %261 : vector<8x128xf32>
    %263 = math.tanh %262 : vector<8x128xf32>
    %cst_57 = arith.constant 5.000000e-01 : f32
    %264 = vector.broadcast %cst_57 : f32 to vector<8x128xf32>
    %265 = arith.mulf %264, %263 : vector<8x128xf32>
    %cst_58 = arith.constant 5.000000e-01 : f32
    %266 = vector.broadcast %cst_58 : f32 to vector<8x128xf32>
    %267 = arith.addf %266, %265 : vector<8x128xf32>
    %268 = vector.broadcast %19 : f32 to vector<8x128xf32>
    %269 = arith.mulf %255, %268 : vector<8x128xf32>
    %270 = vector.broadcast %21 : f32 to vector<8x128xf32>
    %271 = arith.addf %269, %270 : vector<8x128xf32>
    %272 = vector.broadcast %22 : f32 to vector<8x128xf32>
    %273 = arith.mulf %248, %272 : vector<8x128xf32>
    %274 = arith.addf %271, %273 : vector<8x128xf32>
    %275 = math.tanh %274 : vector<8x128xf32>
    %cst_59 = arith.constant 5.000000e-01 : f32
    %276 = vector.broadcast %cst_59 : f32 to vector<8x128xf32>
    %277 = arith.mulf %276, %275 : vector<8x128xf32>
    %cst_60 = arith.constant 5.000000e-01 : f32
    %278 = vector.broadcast %cst_60 : f32 to vector<8x128xf32>
    %279 = arith.addf %278, %277 : vector<8x128xf32>
    %280 = vector.broadcast %5 : f32 to vector<8x128xf32>
    %281 = arith.mulf %255, %280 : vector<8x128xf32>
    %282 = vector.broadcast %11 : f32 to vector<8x128xf32>
    %283 = arith.addf %281, %282 : vector<8x128xf32>
    %284 = vector.broadcast %8 : f32 to vector<8x128xf32>
    %285 = arith.mulf %248, %284 : vector<8x128xf32>
    %286 = vector.broadcast %14 : f32 to vector<8x128xf32>
    %287 = arith.addf %285, %286 : vector<8x128xf32>
    %288 = arith.mulf %267, %287 : vector<8x128xf32>
    %289 = arith.addf %283, %288 : vector<8x128xf32>
    %290 = math.tanh %289 : vector<8x128xf32>
    %291 = arith.subf %248, %290 : vector<8x128xf32>
    %292 = arith.mulf %279, %291 : vector<8x128xf32>
    %293 = arith.addf %290, %292 : vector<8x128xf32>
    %c5_i32 = arith.constant 5 : i32
    %294 = arith.addi %25, %c5_i32 : i32
    %c0_61 = arith.constant 0 : index
    %295 = arith.index_cast %294 : i32 to index
    %c0_62 = arith.constant 0 : index
    %c0_63 = arith.constant 0 : index
    %296 = vector.load %arg7[%c0_61, %295, %c0_62, %c0_63] : memref<1x16x8x128xf32, #tpu.memory_space<vmem>>, vector<1x1x8x128xf32>
    %297 = vector.shape_cast %296 : vector<1x1x8x128xf32> to vector<8x128xf32>
    %298 = vector.shape_cast %293 : vector<8x128xf32> to vector<1x1x8x128xf32>
    tpu.vector_store %arg7[%c0_61, %295, %c0_62, %c0_63], %298 {strides = array<i32>} : memref<1x16x8x128xf32, #tpu.memory_space<vmem>>, vector<1x1x8x128xf32>,
    %299 = vector.extract_strided_slice %28 {offsets = [6, 0, 0], sizes = [1, 8, 128], strides = [1, 1, 1]} : vector<8x8x128xf32> to vector<1x8x128xf32>
    %300 = vector.shape_cast %299 : vector<1x8x128xf32> to vector<8x128xf32>
    %301 = vector.broadcast %15 : f32 to vector<8x128xf32>
    %302 = arith.mulf %300, %301 : vector<8x128xf32>
    %303 = vector.broadcast %17 : f32 to vector<8x128xf32>
    %304 = arith.addf %302, %303 : vector<8x128xf32>
    %305 = vector.broadcast %18 : f32 to vector<8x128xf32>
    %306 = arith.mulf %293, %305 : vector<8x128xf32>
    %307 = arith.addf %304, %306 : vector<8x128xf32>
    %308 = math.tanh %307 : vector<8x128xf32>
    %cst_64 = arith.constant 5.000000e-01 : f32
    %309 = vector.broadcast %cst_64 : f32 to vector<8x128xf32>
    %310 = arith.mulf %309, %308 : vector<8x128xf32>
    %cst_65 = arith.constant 5.000000e-01 : f32
    %311 = vector.broadcast %cst_65 : f32 to vector<8x128xf32>
    %312 = arith.addf %311, %310 : vector<8x128xf32>
    %313 = vector.broadcast %19 : f32 to vector<8x128xf32>
    %314 = arith.mulf %300, %313 : vector<8x128xf32>
    %315 = vector.broadcast %21 : f32 to vector<8x128xf32>
    %316 = arith.addf %314, %315 : vector<8x128xf32>
    %317 = vector.broadcast %22 : f32 to vector<8x128xf32>
    %318 = arith.mulf %293, %317 : vector<8x128xf32>
    %319 = arith.addf %316, %318 : vector<8x128xf32>
    %320 = math.tanh %319 : vector<8x128xf32>
    %cst_66 = arith.constant 5.000000e-01 : f32
    %321 = vector.broadcast %cst_66 : f32 to vector<8x128xf32>
    %322 = arith.mulf %321, %320 : vector<8x128xf32>
    %cst_67 = arith.constant 5.000000e-01 : f32
    %323 = vector.broadcast %cst_67 : f32 to vector<8x128xf32>
    %324 = arith.addf %323, %322 : vector<8x128xf32>
    %325 = vector.broadcast %5 : f32 to vector<8x128xf32>
    %326 = arith.mulf %300, %325 : vector<8x128xf32>
    %327 = vector.broadcast %11 : f32 to vector<8x128xf32>
    %328 = arith.addf %326, %327 : vector<8x128xf32>
    %329 = vector.broadcast %8 : f32 to vector<8x128xf32>
    %330 = arith.mulf %293, %329 : vector<8x128xf32>
    %331 = vector.broadcast %14 : f32 to vector<8x128xf32>
    %332 = arith.addf %330, %331 : vector<8x128xf32>
    %333 = arith.mulf %312, %332 : vector<8x128xf32>
    %334 = arith.addf %328, %333 : vector<8x128xf32>
    %335 = math.tanh %334 : vector<8x128xf32>
    %336 = arith.subf %293, %335 : vector<8x128xf32>
    %337 = arith.mulf %324, %336 : vector<8x128xf32>
    %338 = arith.addf %335, %337 : vector<8x128xf32>
    %c6_i32 = arith.constant 6 : i32
    %339 = arith.addi %25, %c6_i32 : i32
    %c0_68 = arith.constant 0 : index
    %340 = arith.index_cast %339 : i32 to index
    %c0_69 = arith.constant 0 : index
    %c0_70 = arith.constant 0 : index
    %341 = vector.load %arg7[%c0_68, %340, %c0_69, %c0_70] : memref<1x16x8x128xf32, #tpu.memory_space<vmem>>, vector<1x1x8x128xf32>
    %342 = vector.shape_cast %341 : vector<1x1x8x128xf32> to vector<8x128xf32>
    %343 = vector.shape_cast %338 : vector<8x128xf32> to vector<1x1x8x128xf32>
    tpu.vector_store %arg7[%c0_68, %340, %c0_69, %c0_70], %343 {strides = array<i32>} : memref<1x16x8x128xf32, #tpu.memory_space<vmem>>, vector<1x1x8x128xf32>,
    %344 = vector.extract_strided_slice %28 {offsets = [7, 0, 0], sizes = [1, 8, 128], strides = [1, 1, 1]} : vector<8x8x128xf32> to vector<1x8x128xf32>
    %345 = vector.shape_cast %344 : vector<1x8x128xf32> to vector<8x128xf32>
    %346 = vector.broadcast %15 : f32 to vector<8x128xf32>
    %347 = arith.mulf %345, %346 : vector<8x128xf32>
    %348 = vector.broadcast %17 : f32 to vector<8x128xf32>
    %349 = arith.addf %347, %348 : vector<8x128xf32>
    %350 = vector.broadcast %18 : f32 to vector<8x128xf32>
    %351 = arith.mulf %338, %350 : vector<8x128xf32>
    %352 = arith.addf %349, %351 : vector<8x128xf32>
    %353 = math.tanh %352 : vector<8x128xf32>
    %cst_71 = arith.constant 5.000000e-01 : f32
    %354 = vector.broadcast %cst_71 : f32 to vector<8x128xf32>
    %355 = arith.mulf %354, %353 : vector<8x128xf32>
    %cst_72 = arith.constant 5.000000e-01 : f32
    %356 = vector.broadcast %cst_72 : f32 to vector<8x128xf32>
    %357 = arith.addf %356, %355 : vector<8x128xf32>
    %358 = vector.broadcast %19 : f32 to vector<8x128xf32>
    %359 = arith.mulf %345, %358 : vector<8x128xf32>
    %360 = vector.broadcast %21 : f32 to vector<8x128xf32>
    %361 = arith.addf %359, %360 : vector<8x128xf32>
    %362 = vector.broadcast %22 : f32 to vector<8x128xf32>
    %363 = arith.mulf %338, %362 : vector<8x128xf32>
    %364 = arith.addf %361, %363 : vector<8x128xf32>
    %365 = math.tanh %364 : vector<8x128xf32>
    %cst_73 = arith.constant 5.000000e-01 : f32
    %366 = vector.broadcast %cst_73 : f32 to vector<8x128xf32>
    %367 = arith.mulf %366, %365 : vector<8x128xf32>
    %cst_74 = arith.constant 5.000000e-01 : f32
    %368 = vector.broadcast %cst_74 : f32 to vector<8x128xf32>
    %369 = arith.addf %368, %367 : vector<8x128xf32>
    %370 = vector.broadcast %5 : f32 to vector<8x128xf32>
    %371 = arith.mulf %345, %370 : vector<8x128xf32>
    %372 = vector.broadcast %11 : f32 to vector<8x128xf32>
    %373 = arith.addf %371, %372 : vector<8x128xf32>
    %374 = vector.broadcast %8 : f32 to vector<8x128xf32>
    %375 = arith.mulf %338, %374 : vector<8x128xf32>
    %376 = vector.broadcast %14 : f32 to vector<8x128xf32>
    %377 = arith.addf %375, %376 : vector<8x128xf32>
    %378 = arith.mulf %357, %377 : vector<8x128xf32>
    %379 = arith.addf %373, %378 : vector<8x128xf32>
    %380 = math.tanh %379 : vector<8x128xf32>
    %381 = arith.subf %338, %380 : vector<8x128xf32>
    %382 = arith.mulf %369, %381 : vector<8x128xf32>
    %383 = arith.addf %380, %382 : vector<8x128xf32>
    %c7_i32 = arith.constant 7 : i32
    %384 = arith.addi %25, %c7_i32 : i32
    %c0_75 = arith.constant 0 : index
    %385 = arith.index_cast %384 : i32 to index
    %c0_76 = arith.constant 0 : index
    %c0_77 = arith.constant 0 : index
    %386 = vector.load %arg7[%c0_75, %385, %c0_76, %c0_77] : memref<1x16x8x128xf32, #tpu.memory_space<vmem>>, vector<1x1x8x128xf32>
    %387 = vector.shape_cast %386 : vector<1x1x8x128xf32> to vector<8x128xf32>
    %388 = vector.shape_cast %383 : vector<8x128xf32> to vector<1x1x8x128xf32>
    tpu.vector_store %arg7[%c0_75, %385, %c0_76, %c0_77], %388 {strides = array<i32>} : memref<1x16x8x128xf32, #tpu.memory_space<vmem>>, vector<1x1x8x128xf32>,
    %c1_i32_78 = arith.constant 1 : i32
    %c8_i32_79 = arith.constant 8 : i32
    %389 = arith.muli %c1_i32_78, %c8_i32_79 : i32
    %390 = tpu.assume_multiple %389, 8 : i32
    %c0_80 = arith.constant 0 : index
    %391 = arith.index_cast %390 : i32 to index
    %c0_81 = arith.constant 0 : index
    %c0_82 = arith.constant 0 : index
    %392 = vector.load %arg6[%c0_80, %391, %c0_81, %c0_82] : memref<1x16x8x128xf32, #tpu.memory_space<vmem>>, vector<1x8x8x128xf32>
    %393 = vector.shape_cast %392 : vector<1x8x8x128xf32> to vector<8x8x128xf32>
    %394 = vector.extract_strided_slice %393 {offsets = [0, 0, 0], sizes = [1, 8, 128], strides = [1, 1, 1]} : vector<8x8x128xf32> to vector<1x8x128xf32>
    %395 = vector.shape_cast %394 : vector<1x8x128xf32> to vector<8x128xf32>
    %396 = vector.broadcast %15 : f32 to vector<8x128xf32>
    %397 = arith.mulf %395, %396 : vector<8x128xf32>
    %398 = vector.broadcast %17 : f32 to vector<8x128xf32>
    %399 = arith.addf %397, %398 : vector<8x128xf32>
    %400 = vector.broadcast %18 : f32 to vector<8x128xf32>
    %401 = arith.mulf %383, %400 : vector<8x128xf32>
    %402 = arith.addf %399, %401 : vector<8x128xf32>
    %403 = math.tanh %402 : vector<8x128xf32>
    %cst_83 = arith.constant 5.000000e-01 : f32
    %404 = vector.broadcast %cst_83 : f32 to vector<8x128xf32>
    %405 = arith.mulf %404, %403 : vector<8x128xf32>
    %cst_84 = arith.constant 5.000000e-01 : f32
    %406 = vector.broadcast %cst_84 : f32 to vector<8x128xf32>
    %407 = arith.addf %406, %405 : vector<8x128xf32>
    %408 = vector.broadcast %19 : f32 to vector<8x128xf32>
    %409 = arith.mulf %395, %408 : vector<8x128xf32>
    %410 = vector.broadcast %21 : f32 to vector<8x128xf32>
    %411 = arith.addf %409, %410 : vector<8x128xf32>
    %412 = vector.broadcast %22 : f32 to vector<8x128xf32>
    %413 = arith.mulf %383, %412 : vector<8x128xf32>
    %414 = arith.addf %411, %413 : vector<8x128xf32>
    %415 = math.tanh %414 : vector<8x128xf32>
    %cst_85 = arith.constant 5.000000e-01 : f32
    %416 = vector.broadcast %cst_85 : f32 to vector<8x128xf32>
    %417 = arith.mulf %416, %415 : vector<8x128xf32>
    %cst_86 = arith.constant 5.000000e-01 : f32
    %418 = vector.broadcast %cst_86 : f32 to vector<8x128xf32>
    %419 = arith.addf %418, %417 : vector<8x128xf32>
    %420 = vector.broadcast %5 : f32 to vector<8x128xf32>
    %421 = arith.mulf %395, %420 : vector<8x128xf32>
    %422 = vector.broadcast %11 : f32 to vector<8x128xf32>
    %423 = arith.addf %421, %422 : vector<8x128xf32>
    %424 = vector.broadcast %8 : f32 to vector<8x128xf32>
    %425 = arith.mulf %383, %424 : vector<8x128xf32>
    %426 = vector.broadcast %14 : f32 to vector<8x128xf32>
    %427 = arith.addf %425, %426 : vector<8x128xf32>
    %428 = arith.mulf %407, %427 : vector<8x128xf32>
    %429 = arith.addf %423, %428 : vector<8x128xf32>
    %430 = math.tanh %429 : vector<8x128xf32>
    %431 = arith.subf %383, %430 : vector<8x128xf32>
    %432 = arith.mulf %419, %431 : vector<8x128xf32>
    %433 = arith.addf %430, %432 : vector<8x128xf32>
    %c0_i32_87 = arith.constant 0 : i32
    %434 = arith.addi %390, %c0_i32_87 : i32
    %c0_88 = arith.constant 0 : index
    %435 = arith.index_cast %434 : i32 to index
    %c0_89 = arith.constant 0 : index
    %c0_90 = arith.constant 0 : index
    %436 = vector.load %arg7[%c0_88, %435, %c0_89, %c0_90] : memref<1x16x8x128xf32, #tpu.memory_space<vmem>>, vector<1x1x8x128xf32>
    %437 = vector.shape_cast %436 : vector<1x1x8x128xf32> to vector<8x128xf32>
    %438 = vector.shape_cast %433 : vector<8x128xf32> to vector<1x1x8x128xf32>
    tpu.vector_store %arg7[%c0_88, %435, %c0_89, %c0_90], %438 {strides = array<i32>} : memref<1x16x8x128xf32, #tpu.memory_space<vmem>>, vector<1x1x8x128xf32>,
    %439 = vector.extract_strided_slice %393 {offsets = [1, 0, 0], sizes = [1, 8, 128], strides = [1, 1, 1]} : vector<8x8x128xf32> to vector<1x8x128xf32>
    %440 = vector.shape_cast %439 : vector<1x8x128xf32> to vector<8x128xf32>
    %441 = vector.broadcast %15 : f32 to vector<8x128xf32>
    %442 = arith.mulf %440, %441 : vector<8x128xf32>
    %443 = vector.broadcast %17 : f32 to vector<8x128xf32>
    %444 = arith.addf %442, %443 : vector<8x128xf32>
    %445 = vector.broadcast %18 : f32 to vector<8x128xf32>
    %446 = arith.mulf %433, %445 : vector<8x128xf32>
    %447 = arith.addf %444, %446 : vector<8x128xf32>
    %448 = math.tanh %447 : vector<8x128xf32>
    %cst_91 = arith.constant 5.000000e-01 : f32
    %449 = vector.broadcast %cst_91 : f32 to vector<8x128xf32>
    %450 = arith.mulf %449, %448 : vector<8x128xf32>
    %cst_92 = arith.constant 5.000000e-01 : f32
    %451 = vector.broadcast %cst_92 : f32 to vector<8x128xf32>
    %452 = arith.addf %451, %450 : vector<8x128xf32>
    %453 = vector.broadcast %19 : f32 to vector<8x128xf32>
    %454 = arith.mulf %440, %453 : vector<8x128xf32>
    %455 = vector.broadcast %21 : f32 to vector<8x128xf32>
    %456 = arith.addf %454, %455 : vector<8x128xf32>
    %457 = vector.broadcast %22 : f32 to vector<8x128xf32>
    %458 = arith.mulf %433, %457 : vector<8x128xf32>
    %459 = arith.addf %456, %458 : vector<8x128xf32>
    %460 = math.tanh %459 : vector<8x128xf32>
    %cst_93 = arith.constant 5.000000e-01 : f32
    %461 = vector.broadcast %cst_93 : f32 to vector<8x128xf32>
    %462 = arith.mulf %461, %460 : vector<8x128xf32>
    %cst_94 = arith.constant 5.000000e-01 : f32
    %463 = vector.broadcast %cst_94 : f32 to vector<8x128xf32>
    %464 = arith.addf %463, %462 : vector<8x128xf32>
    %465 = vector.broadcast %5 : f32 to vector<8x128xf32>
    %466 = arith.mulf %440, %465 : vector<8x128xf32>
    %467 = vector.broadcast %11 : f32 to vector<8x128xf32>
    %468 = arith.addf %466, %467 : vector<8x128xf32>
    %469 = vector.broadcast %8 : f32 to vector<8x128xf32>
    %470 = arith.mulf %433, %469 : vector<8x128xf32>
    %471 = vector.broadcast %14 : f32 to vector<8x128xf32>
    %472 = arith.addf %470, %471 : vector<8x128xf32>
    %473 = arith.mulf %452, %472 : vector<8x128xf32>
    %474 = arith.addf %468, %473 : vector<8x128xf32>
    %475 = math.tanh %474 : vector<8x128xf32>
    %476 = arith.subf %433, %475 : vector<8x128xf32>
    %477 = arith.mulf %464, %476 : vector<8x128xf32>
    %478 = arith.addf %475, %477 : vector<8x128xf32>
    %c1_i32_95 = arith.constant 1 : i32
    %479 = arith.addi %390, %c1_i32_95 : i32
    %c0_96 = arith.constant 0 : index
    %480 = arith.index_cast %479 : i32 to index
    %c0_97 = arith.constant 0 : index
    %c0_98 = arith.constant 0 : index
    %481 = vector.load %arg7[%c0_96, %480, %c0_97, %c0_98] : memref<1x16x8x128xf32, #tpu.memory_space<vmem>>, vector<1x1x8x128xf32>
    %482 = vector.shape_cast %481 : vector<1x1x8x128xf32> to vector<8x128xf32>
    %483 = vector.shape_cast %478 : vector<8x128xf32> to vector<1x1x8x128xf32>
    tpu.vector_store %arg7[%c0_96, %480, %c0_97, %c0_98], %483 {strides = array<i32>} : memref<1x16x8x128xf32, #tpu.memory_space<vmem>>, vector<1x1x8x128xf32>,
    %484 = vector.extract_strided_slice %393 {offsets = [2, 0, 0], sizes = [1, 8, 128], strides = [1, 1, 1]} : vector<8x8x128xf32> to vector<1x8x128xf32>
    %485 = vector.shape_cast %484 : vector<1x8x128xf32> to vector<8x128xf32>
    %486 = vector.broadcast %15 : f32 to vector<8x128xf32>
    %487 = arith.mulf %485, %486 : vector<8x128xf32>
    %488 = vector.broadcast %17 : f32 to vector<8x128xf32>
    %489 = arith.addf %487, %488 : vector<8x128xf32>
    %490 = vector.broadcast %18 : f32 to vector<8x128xf32>
    %491 = arith.mulf %478, %490 : vector<8x128xf32>
    %492 = arith.addf %489, %491 : vector<8x128xf32>
    %493 = math.tanh %492 : vector<8x128xf32>
    %cst_99 = arith.constant 5.000000e-01 : f32
    %494 = vector.broadcast %cst_99 : f32 to vector<8x128xf32>
    %495 = arith.mulf %494, %493 : vector<8x128xf32>
    %cst_100 = arith.constant 5.000000e-01 : f32
    %496 = vector.broadcast %cst_100 : f32 to vector<8x128xf32>
    %497 = arith.addf %496, %495 : vector<8x128xf32>
    %498 = vector.broadcast %19 : f32 to vector<8x128xf32>
    %499 = arith.mulf %485, %498 : vector<8x128xf32>
    %500 = vector.broadcast %21 : f32 to vector<8x128xf32>
    %501 = arith.addf %499, %500 : vector<8x128xf32>
    %502 = vector.broadcast %22 : f32 to vector<8x128xf32>
    %503 = arith.mulf %478, %502 : vector<8x128xf32>
    %504 = arith.addf %501, %503 : vector<8x128xf32>
    %505 = math.tanh %504 : vector<8x128xf32>
    %cst_101 = arith.constant 5.000000e-01 : f32
    %506 = vector.broadcast %cst_101 : f32 to vector<8x128xf32>
    %507 = arith.mulf %506, %505 : vector<8x128xf32>
    %cst_102 = arith.constant 5.000000e-01 : f32
    %508 = vector.broadcast %cst_102 : f32 to vector<8x128xf32>
    %509 = arith.addf %508, %507 : vector<8x128xf32>
    %510 = vector.broadcast %5 : f32 to vector<8x128xf32>
    %511 = arith.mulf %485, %510 : vector<8x128xf32>
    %512 = vector.broadcast %11 : f32 to vector<8x128xf32>
    %513 = arith.addf %511, %512 : vector<8x128xf32>
    %514 = vector.broadcast %8 : f32 to vector<8x128xf32>
    %515 = arith.mulf %478, %514 : vector<8x128xf32>
    %516 = vector.broadcast %14 : f32 to vector<8x128xf32>
    %517 = arith.addf %515, %516 : vector<8x128xf32>
    %518 = arith.mulf %497, %517 : vector<8x128xf32>
    %519 = arith.addf %513, %518 : vector<8x128xf32>
    %520 = math.tanh %519 : vector<8x128xf32>
    %521 = arith.subf %478, %520 : vector<8x128xf32>
    %522 = arith.mulf %509, %521 : vector<8x128xf32>
    %523 = arith.addf %520, %522 : vector<8x128xf32>
    %c2_i32_103 = arith.constant 2 : i32
    %524 = arith.addi %390, %c2_i32_103 : i32
    %c0_104 = arith.constant 0 : index
    %525 = arith.index_cast %524 : i32 to index
    %c0_105 = arith.constant 0 : index
    %c0_106 = arith.constant 0 : index
    %526 = vector.load %arg7[%c0_104, %525, %c0_105, %c0_106] : memref<1x16x8x128xf32, #tpu.memory_space<vmem>>, vector<1x1x8x128xf32>
    %527 = vector.shape_cast %526 : vector<1x1x8x128xf32> to vector<8x128xf32>
    %528 = vector.shape_cast %523 : vector<8x128xf32> to vector<1x1x8x128xf32>
    tpu.vector_store %arg7[%c0_104, %525, %c0_105, %c0_106], %528 {strides = array<i32>} : memref<1x16x8x128xf32, #tpu.memory_space<vmem>>, vector<1x1x8x128xf32>,
    %529 = vector.extract_strided_slice %393 {offsets = [3, 0, 0], sizes = [1, 8, 128], strides = [1, 1, 1]} : vector<8x8x128xf32> to vector<1x8x128xf32>
    %530 = vector.shape_cast %529 : vector<1x8x128xf32> to vector<8x128xf32>
    %531 = vector.broadcast %15 : f32 to vector<8x128xf32>
    %532 = arith.mulf %530, %531 : vector<8x128xf32>
    %533 = vector.broadcast %17 : f32 to vector<8x128xf32>
    %534 = arith.addf %532, %533 : vector<8x128xf32>
    %535 = vector.broadcast %18 : f32 to vector<8x128xf32>
    %536 = arith.mulf %523, %535 : vector<8x128xf32>
    %537 = arith.addf %534, %536 : vector<8x128xf32>
    %538 = math.tanh %537 : vector<8x128xf32>
    %cst_107 = arith.constant 5.000000e-01 : f32
    %539 = vector.broadcast %cst_107 : f32 to vector<8x128xf32>
    %540 = arith.mulf %539, %538 : vector<8x128xf32>
    %cst_108 = arith.constant 5.000000e-01 : f32
    %541 = vector.broadcast %cst_108 : f32 to vector<8x128xf32>
    %542 = arith.addf %541, %540 : vector<8x128xf32>
    %543 = vector.broadcast %19 : f32 to vector<8x128xf32>
    %544 = arith.mulf %530, %543 : vector<8x128xf32>
    %545 = vector.broadcast %21 : f32 to vector<8x128xf32>
    %546 = arith.addf %544, %545 : vector<8x128xf32>
    %547 = vector.broadcast %22 : f32 to vector<8x128xf32>
    %548 = arith.mulf %523, %547 : vector<8x128xf32>
    %549 = arith.addf %546, %548 : vector<8x128xf32>
    %550 = math.tanh %549 : vector<8x128xf32>
    %cst_109 = arith.constant 5.000000e-01 : f32
    %551 = vector.broadcast %cst_109 : f32 to vector<8x128xf32>
    %552 = arith.mulf %551, %550 : vector<8x128xf32>
    %cst_110 = arith.constant 5.000000e-01 : f32
    %553 = vector.broadcast %cst_110 : f32 to vector<8x128xf32>
    %554 = arith.addf %553, %552 : vector<8x128xf32>
    %555 = vector.broadcast %5 : f32 to vector<8x128xf32>
    %556 = arith.mulf %530, %555 : vector<8x128xf32>
    %557 = vector.broadcast %11 : f32 to vector<8x128xf32>
    %558 = arith.addf %556, %557 : vector<8x128xf32>
    %559 = vector.broadcast %8 : f32 to vector<8x128xf32>
    %560 = arith.mulf %523, %559 : vector<8x128xf32>
    %561 = vector.broadcast %14 : f32 to vector<8x128xf32>
    %562 = arith.addf %560, %561 : vector<8x128xf32>
    %563 = arith.mulf %542, %562 : vector<8x128xf32>
    %564 = arith.addf %558, %563 : vector<8x128xf32>
    %565 = math.tanh %564 : vector<8x128xf32>
    %566 = arith.subf %523, %565 : vector<8x128xf32>
    %567 = arith.mulf %554, %566 : vector<8x128xf32>
    %568 = arith.addf %565, %567 : vector<8x128xf32>
    %c3_i32_111 = arith.constant 3 : i32
    %569 = arith.addi %390, %c3_i32_111 : i32
    %c0_112 = arith.constant 0 : index
    %570 = arith.index_cast %569 : i32 to index
    %c0_113 = arith.constant 0 : index
    %c0_114 = arith.constant 0 : index
    %571 = vector.load %arg7[%c0_112, %570, %c0_113, %c0_114] : memref<1x16x8x128xf32, #tpu.memory_space<vmem>>, vector<1x1x8x128xf32>
    %572 = vector.shape_cast %571 : vector<1x1x8x128xf32> to vector<8x128xf32>
    %573 = vector.shape_cast %568 : vector<8x128xf32> to vector<1x1x8x128xf32>
    tpu.vector_store %arg7[%c0_112, %570, %c0_113, %c0_114], %573 {strides = array<i32>} : memref<1x16x8x128xf32, #tpu.memory_space<vmem>>, vector<1x1x8x128xf32>,
    %574 = vector.extract_strided_slice %393 {offsets = [4, 0, 0], sizes = [1, 8, 128], strides = [1, 1, 1]} : vector<8x8x128xf32> to vector<1x8x128xf32>
    %575 = vector.shape_cast %574 : vector<1x8x128xf32> to vector<8x128xf32>
    %576 = vector.broadcast %15 : f32 to vector<8x128xf32>
    %577 = arith.mulf %575, %576 : vector<8x128xf32>
    %578 = vector.broadcast %17 : f32 to vector<8x128xf32>
    %579 = arith.addf %577, %578 : vector<8x128xf32>
    %580 = vector.broadcast %18 : f32 to vector<8x128xf32>
    %581 = arith.mulf %568, %580 : vector<8x128xf32>
    %582 = arith.addf %579, %581 : vector<8x128xf32>
    %583 = math.tanh %582 : vector<8x128xf32>
    %cst_115 = arith.constant 5.000000e-01 : f32
    %584 = vector.broadcast %cst_115 : f32 to vector<8x128xf32>
    %585 = arith.mulf %584, %583 : vector<8x128xf32>
    %cst_116 = arith.constant 5.000000e-01 : f32
    %586 = vector.broadcast %cst_116 : f32 to vector<8x128xf32>
    %587 = arith.addf %586, %585 : vector<8x128xf32>
    %588 = vector.broadcast %19 : f32 to vector<8x128xf32>
    %589 = arith.mulf %575, %588 : vector<8x128xf32>
    %590 = vector.broadcast %21 : f32 to vector<8x128xf32>
    %591 = arith.addf %589, %590 : vector<8x128xf32>
    %592 = vector.broadcast %22 : f32 to vector<8x128xf32>
    %593 = arith.mulf %568, %592 : vector<8x128xf32>
    %594 = arith.addf %591, %593 : vector<8x128xf32>
    %595 = math.tanh %594 : vector<8x128xf32>
    %cst_117 = arith.constant 5.000000e-01 : f32
    %596 = vector.broadcast %cst_117 : f32 to vector<8x128xf32>
    %597 = arith.mulf %596, %595 : vector<8x128xf32>
    %cst_118 = arith.constant 5.000000e-01 : f32
    %598 = vector.broadcast %cst_118 : f32 to vector<8x128xf32>
    %599 = arith.addf %598, %597 : vector<8x128xf32>
    %600 = vector.broadcast %5 : f32 to vector<8x128xf32>
    %601 = arith.mulf %575, %600 : vector<8x128xf32>
    %602 = vector.broadcast %11 : f32 to vector<8x128xf32>
    %603 = arith.addf %601, %602 : vector<8x128xf32>
    %604 = vector.broadcast %8 : f32 to vector<8x128xf32>
    %605 = arith.mulf %568, %604 : vector<8x128xf32>
    %606 = vector.broadcast %14 : f32 to vector<8x128xf32>
    %607 = arith.addf %605, %606 : vector<8x128xf32>
    %608 = arith.mulf %587, %607 : vector<8x128xf32>
    %609 = arith.addf %603, %608 : vector<8x128xf32>
    %610 = math.tanh %609 : vector<8x128xf32>
    %611 = arith.subf %568, %610 : vector<8x128xf32>
    %612 = arith.mulf %599, %611 : vector<8x128xf32>
    %613 = arith.addf %610, %612 : vector<8x128xf32>
    %c4_i32_119 = arith.constant 4 : i32
    %614 = arith.addi %390, %c4_i32_119 : i32
    %c0_120 = arith.constant 0 : index
    %615 = arith.index_cast %614 : i32 to index
    %c0_121 = arith.constant 0 : index
    %c0_122 = arith.constant 0 : index
    %616 = vector.load %arg7[%c0_120, %615, %c0_121, %c0_122] : memref<1x16x8x128xf32, #tpu.memory_space<vmem>>, vector<1x1x8x128xf32>
    %617 = vector.shape_cast %616 : vector<1x1x8x128xf32> to vector<8x128xf32>
    %618 = vector.shape_cast %613 : vector<8x128xf32> to vector<1x1x8x128xf32>
    tpu.vector_store %arg7[%c0_120, %615, %c0_121, %c0_122], %618 {strides = array<i32>} : memref<1x16x8x128xf32, #tpu.memory_space<vmem>>, vector<1x1x8x128xf32>,
    %619 = vector.extract_strided_slice %393 {offsets = [5, 0, 0], sizes = [1, 8, 128], strides = [1, 1, 1]} : vector<8x8x128xf32> to vector<1x8x128xf32>
    %620 = vector.shape_cast %619 : vector<1x8x128xf32> to vector<8x128xf32>
    %621 = vector.broadcast %15 : f32 to vector<8x128xf32>
    %622 = arith.mulf %620, %621 : vector<8x128xf32>
    %623 = vector.broadcast %17 : f32 to vector<8x128xf32>
    %624 = arith.addf %622, %623 : vector<8x128xf32>
    %625 = vector.broadcast %18 : f32 to vector<8x128xf32>
    %626 = arith.mulf %613, %625 : vector<8x128xf32>
    %627 = arith.addf %624, %626 : vector<8x128xf32>
    %628 = math.tanh %627 : vector<8x128xf32>
    %cst_123 = arith.constant 5.000000e-01 : f32
    %629 = vector.broadcast %cst_123 : f32 to vector<8x128xf32>
    %630 = arith.mulf %629, %628 : vector<8x128xf32>
    %cst_124 = arith.constant 5.000000e-01 : f32
    %631 = vector.broadcast %cst_124 : f32 to vector<8x128xf32>
    %632 = arith.addf %631, %630 : vector<8x128xf32>
    %633 = vector.broadcast %19 : f32 to vector<8x128xf32>
    %634 = arith.mulf %620, %633 : vector<8x128xf32>
    %635 = vector.broadcast %21 : f32 to vector<8x128xf32>
    %636 = arith.addf %634, %635 : vector<8x128xf32>
    %637 = vector.broadcast %22 : f32 to vector<8x128xf32>
    %638 = arith.mulf %613, %637 : vector<8x128xf32>
    %639 = arith.addf %636, %638 : vector<8x128xf32>
    %640 = math.tanh %639 : vector<8x128xf32>
    %cst_125 = arith.constant 5.000000e-01 : f32
    %641 = vector.broadcast %cst_125 : f32 to vector<8x128xf32>
    %642 = arith.mulf %641, %640 : vector<8x128xf32>
    %cst_126 = arith.constant 5.000000e-01 : f32
    %643 = vector.broadcast %cst_126 : f32 to vector<8x128xf32>
    %644 = arith.addf %643, %642 : vector<8x128xf32>
    %645 = vector.broadcast %5 : f32 to vector<8x128xf32>
    %646 = arith.mulf %620, %645 : vector<8x128xf32>
    %647 = vector.broadcast %11 : f32 to vector<8x128xf32>
    %648 = arith.addf %646, %647 : vector<8x128xf32>
    %649 = vector.broadcast %8 : f32 to vector<8x128xf32>
    %650 = arith.mulf %613, %649 : vector<8x128xf32>
    %651 = vector.broadcast %14 : f32 to vector<8x128xf32>
    %652 = arith.addf %650, %651 : vector<8x128xf32>
    %653 = arith.mulf %632, %652 : vector<8x128xf32>
    %654 = arith.addf %648, %653 : vector<8x128xf32>
    %655 = math.tanh %654 : vector<8x128xf32>
    %656 = arith.subf %613, %655 : vector<8x128xf32>
    %657 = arith.mulf %644, %656 : vector<8x128xf32>
    %658 = arith.addf %655, %657 : vector<8x128xf32>
    %c5_i32_127 = arith.constant 5 : i32
    %659 = arith.addi %390, %c5_i32_127 : i32
    %c0_128 = arith.constant 0 : index
    %660 = arith.index_cast %659 : i32 to index
    %c0_129 = arith.constant 0 : index
    %c0_130 = arith.constant 0 : index
    %661 = vector.load %arg7[%c0_128, %660, %c0_129, %c0_130] : memref<1x16x8x128xf32, #tpu.memory_space<vmem>>, vector<1x1x8x128xf32>
    %662 = vector.shape_cast %661 : vector<1x1x8x128xf32> to vector<8x128xf32>
    %663 = vector.shape_cast %658 : vector<8x128xf32> to vector<1x1x8x128xf32>
    tpu.vector_store %arg7[%c0_128, %660, %c0_129, %c0_130], %663 {strides = array<i32>} : memref<1x16x8x128xf32, #tpu.memory_space<vmem>>, vector<1x1x8x128xf32>,
    %664 = vector.extract_strided_slice %393 {offsets = [6, 0, 0], sizes = [1, 8, 128], strides = [1, 1, 1]} : vector<8x8x128xf32> to vector<1x8x128xf32>
    %665 = vector.shape_cast %664 : vector<1x8x128xf32> to vector<8x128xf32>
    %666 = vector.broadcast %15 : f32 to vector<8x128xf32>
    %667 = arith.mulf %665, %666 : vector<8x128xf32>
    %668 = vector.broadcast %17 : f32 to vector<8x128xf32>
    %669 = arith.addf %667, %668 : vector<8x128xf32>
    %670 = vector.broadcast %18 : f32 to vector<8x128xf32>
    %671 = arith.mulf %658, %670 : vector<8x128xf32>
    %672 = arith.addf %669, %671 : vector<8x128xf32>
    %673 = math.tanh %672 : vector<8x128xf32>
    %cst_131 = arith.constant 5.000000e-01 : f32
    %674 = vector.broadcast %cst_131 : f32 to vector<8x128xf32>
    %675 = arith.mulf %674, %673 : vector<8x128xf32>
    %cst_132 = arith.constant 5.000000e-01 : f32
    %676 = vector.broadcast %cst_132 : f32 to vector<8x128xf32>
    %677 = arith.addf %676, %675 : vector<8x128xf32>
    %678 = vector.broadcast %19 : f32 to vector<8x128xf32>
    %679 = arith.mulf %665, %678 : vector<8x128xf32>
    %680 = vector.broadcast %21 : f32 to vector<8x128xf32>
    %681 = arith.addf %679, %680 : vector<8x128xf32>
    %682 = vector.broadcast %22 : f32 to vector<8x128xf32>
    %683 = arith.mulf %658, %682 : vector<8x128xf32>
    %684 = arith.addf %681, %683 : vector<8x128xf32>
    %685 = math.tanh %684 : vector<8x128xf32>
    %cst_133 = arith.constant 5.000000e-01 : f32
    %686 = vector.broadcast %cst_133 : f32 to vector<8x128xf32>
    %687 = arith.mulf %686, %685 : vector<8x128xf32>
    %cst_134 = arith.constant 5.000000e-01 : f32
    %688 = vector.broadcast %cst_134 : f32 to vector<8x128xf32>
    %689 = arith.addf %688, %687 : vector<8x128xf32>
    %690 = vector.broadcast %5 : f32 to vector<8x128xf32>
    %691 = arith.mulf %665, %690 : vector<8x128xf32>
    %692 = vector.broadcast %11 : f32 to vector<8x128xf32>
    %693 = arith.addf %691, %692 : vector<8x128xf32>
    %694 = vector.broadcast %8 : f32 to vector<8x128xf32>
    %695 = arith.mulf %658, %694 : vector<8x128xf32>
    %696 = vector.broadcast %14 : f32 to vector<8x128xf32>
    %697 = arith.addf %695, %696 : vector<8x128xf32>
    %698 = arith.mulf %677, %697 : vector<8x128xf32>
    %699 = arith.addf %693, %698 : vector<8x128xf32>
    %700 = math.tanh %699 : vector<8x128xf32>
    %701 = arith.subf %658, %700 : vector<8x128xf32>
    %702 = arith.mulf %689, %701 : vector<8x128xf32>
    %703 = arith.addf %700, %702 : vector<8x128xf32>
    %c6_i32_135 = arith.constant 6 : i32
    %704 = arith.addi %390, %c6_i32_135 : i32
    %c0_136 = arith.constant 0 : index
    %705 = arith.index_cast %704 : i32 to index
    %c0_137 = arith.constant 0 : index
    %c0_138 = arith.constant 0 : index
    %706 = vector.load %arg7[%c0_136, %705, %c0_137, %c0_138] : memref<1x16x8x128xf32, #tpu.memory_space<vmem>>, vector<1x1x8x128xf32>
    %707 = vector.shape_cast %706 : vector<1x1x8x128xf32> to vector<8x128xf32>
    %708 = vector.shape_cast %703 : vector<8x128xf32> to vector<1x1x8x128xf32>
    tpu.vector_store %arg7[%c0_136, %705, %c0_137, %c0_138], %708 {strides = array<i32>} : memref<1x16x8x128xf32, #tpu.memory_space<vmem>>, vector<1x1x8x128xf32>,
    %709 = vector.extract_strided_slice %393 {offsets = [7, 0, 0], sizes = [1, 8, 128], strides = [1, 1, 1]} : vector<8x8x128xf32> to vector<1x8x128xf32>
    %710 = vector.shape_cast %709 : vector<1x8x128xf32> to vector<8x128xf32>
    %711 = vector.broadcast %15 : f32 to vector<8x128xf32>
    %712 = arith.mulf %710, %711 : vector<8x128xf32>
    %713 = vector.broadcast %17 : f32 to vector<8x128xf32>
    %714 = arith.addf %712, %713 : vector<8x128xf32>
    %715 = vector.broadcast %18 : f32 to vector<8x128xf32>
    %716 = arith.mulf %703, %715 : vector<8x128xf32>
    %717 = arith.addf %714, %716 : vector<8x128xf32>
    %718 = math.tanh %717 : vector<8x128xf32>
    %cst_139 = arith.constant 5.000000e-01 : f32
    %719 = vector.broadcast %cst_139 : f32 to vector<8x128xf32>
    %720 = arith.mulf %719, %718 : vector<8x128xf32>
    %cst_140 = arith.constant 5.000000e-01 : f32
    %721 = vector.broadcast %cst_140 : f32 to vector<8x128xf32>
    %722 = arith.addf %721, %720 : vector<8x128xf32>
    %723 = vector.broadcast %19 : f32 to vector<8x128xf32>
    %724 = arith.mulf %710, %723 : vector<8x128xf32>
    %725 = vector.broadcast %21 : f32 to vector<8x128xf32>
    %726 = arith.addf %724, %725 : vector<8x128xf32>
    %727 = vector.broadcast %22 : f32 to vector<8x128xf32>
    %728 = arith.mulf %703, %727 : vector<8x128xf32>
    %729 = arith.addf %726, %728 : vector<8x128xf32>
    %730 = math.tanh %729 : vector<8x128xf32>
    %cst_141 = arith.constant 5.000000e-01 : f32
    %731 = vector.broadcast %cst_141 : f32 to vector<8x128xf32>
    %732 = arith.mulf %731, %730 : vector<8x128xf32>
    %cst_142 = arith.constant 5.000000e-01 : f32
    %733 = vector.broadcast %cst_142 : f32 to vector<8x128xf32>
    %734 = arith.addf %733, %732 : vector<8x128xf32>
    %735 = vector.broadcast %5 : f32 to vector<8x128xf32>
    %736 = arith.mulf %710, %735 : vector<8x128xf32>
    %737 = vector.broadcast %11 : f32 to vector<8x128xf32>
    %738 = arith.addf %736, %737 : vector<8x128xf32>
    %739 = vector.broadcast %8 : f32 to vector<8x128xf32>
    %740 = arith.mulf %703, %739 : vector<8x128xf32>
    %741 = vector.broadcast %14 : f32 to vector<8x128xf32>
    %742 = arith.addf %740, %741 : vector<8x128xf32>
    %743 = arith.mulf %722, %742 : vector<8x128xf32>
    %744 = arith.addf %738, %743 : vector<8x128xf32>
    %745 = math.tanh %744 : vector<8x128xf32>
    %746 = arith.subf %703, %745 : vector<8x128xf32>
    %747 = arith.mulf %734, %746 : vector<8x128xf32>
    %748 = arith.addf %745, %747 : vector<8x128xf32>
    %c7_i32_143 = arith.constant 7 : i32
    %749 = arith.addi %390, %c7_i32_143 : i32
    %c0_144 = arith.constant 0 : index
    %750 = arith.index_cast %749 : i32 to index
    %c0_145 = arith.constant 0 : index
    %c0_146 = arith.constant 0 : index
    %751 = vector.load %arg7[%c0_144, %750, %c0_145, %c0_146] : memref<1x16x8x128xf32, #tpu.memory_space<vmem>>, vector<1x1x8x128xf32>
    %752 = vector.shape_cast %751 : vector<1x1x8x128xf32> to vector<8x128xf32>
    %753 = vector.shape_cast %748 : vector<8x128xf32> to vector<1x1x8x128xf32>
    tpu.vector_store %arg7[%c0_144, %750, %c0_145, %c0_146], %753 {strides = array<i32>} : memref<1x16x8x128xf32, #tpu.memory_space<vmem>>, vector<1x1x8x128xf32>,
    %c2_i32_147 = arith.constant 2 : i32
    %c0_148 = arith.constant 0 : index
    %c0_149 = arith.constant 0 : index
    %754 = vector.load %arg8[%c0_148, %c0_149] : memref<8x128xf32, #tpu.memory_space<vmem>>, vector<8x128xf32>
    tpu.vector_store %arg8[%c0_148, %c0_149], %748 {strides = array<i32>} : memref<8x128xf32, #tpu.memory_space<vmem>>, vector<8x128xf32>,
    return
  }
  func.func @transform_0(%arg0: i32, %arg1: i32) -> i32 {
    %c0_i32 = arith.constant 0 : i32
    %c0_i32_0 = arith.constant 0 : i32
    return %c0_i32 : i32
  }
  func.func @transform_1(%arg0: i32, %arg1: i32) -> i32 {
    %c0_i32 = arith.constant 0 : i32
    %c0_i32_0 = arith.constant 0 : i32
    return %c0_i32 : i32
  }
  func.func @transform_2(%arg0: i32, %arg1: i32) -> i32 {
    %c0_i32 = arith.constant 0 : i32
    %c0_i32_0 = arith.constant 0 : i32
    return %c0_i32 : i32
  }
  func.func @transform_3(%arg0: i32, %arg1: i32) -> i32 {
    %c0_i32 = arith.constant 0 : i32
    %c0_i32_0 = arith.constant 0 : i32
    return %c0_i32 : i32
  }
  func.func @transform_4(%arg0: i32, %arg1: i32) -> (i32, i32, i32, i32) {
    %c0_i32 = arith.constant 0 : i32
    %c0_i32_0 = arith.constant 0 : i32
    %c0_i32_1 = arith.constant 0 : i32
    return %arg0, %arg1, %c0_i32, %c0_i32_0 : i32, i32, i32, i32
  }
  func.func @transform_5(%arg0: i32, %arg1: i32) -> (i32, i32, i32, i32) {
    %c0_i32 = arith.constant 0 : i32
    %c0_i32_0 = arith.constant 0 : i32
    %c0_i32_1 = arith.constant 0 : i32
    return %arg0, %arg1, %c0_i32, %c0_i32_0 : i32, i32, i32, i32
  }
}

</mosaic_0001>

<llo_original>
// kernel: tpu_custom_call.1
$region0: #{tpu_custom_call.1}
  #allocation0 [shape = 'u32[]', space=smem, size = 0x4, offset = 0x4, fixed_abs, tag = 'smem constant byte address 0x4 - core index']
  #allocation1 [shape = 'u32[144,128]{1,0:T(1,128)}', space=vmem, size = 0x12000, scoped, tag = 'internal scratch']
  #allocation2 [shape = 'f32[8,128]{1,0:T(8,128)}', space=vmem, size = 0x1000, scoped, tag = 'scratch operand']
  %s0 = inlined_call_operand.hbm [shape: f32[3], index: 0, kind: input, shape index: {}]
  %s1 = inlined_call_operand.vmem [shape: f32[3], index: 1, kind: input, shape index: {}]
  %s2 = inlined_call_operand.vmem [shape: f32[3], index: 2, kind: input, shape index: {}]
  %s3 = inlined_call_operand.vmem [shape: f32[3], index: 3, kind: input, shape index: {}]
  %s4 = inlined_call_operand.hbm [shape: f32[1,16,8,128], index: 4, kind: input, shape index: {}]
  %s5 = inlined_call_operand.hbm [shape: f32[1,16,8,128], index: 5, kind: output, shape index: {}]
  %s6 = sld [smem:[#allocation0]]
  $region54: #{tpu_custom_call.1} parent=0
    _
  %s8 = ssub.s32 1, %s6
  %s9 = scalar_select 0, %s8, %s6
  $region1: #{tpu_custom_call.1} parent=0
    #allocation3 [shape = 'u8[512]{0}', space=smem, size = 0x200, scoped, tag = 'input window, operand 0, single buffered']
    #allocation4 [shape = 's32[1]{0}', space=sflag, size = 0x4, scoped, tag = 'scoped memory for tpu_custom_call.1']
    #allocation5 [shape = 's32[1]{0}', space=sflag, size = 0x4, scoped, tag = 'scoped memory for tpu_custom_call.1']
    #allocation6 [shape = 's32[1]{0}', space=sflag, size = 0x4, scoped, tag = 'scoped memory for tpu_custom_call.1']
    #allocation7 [shape = 's32[1]{0}', space=sflag, size = 0x4, scoped, tag = 'scoped memory for tpu_custom_call.1']
    #allocation8 [shape = 'u8[512]{0}', space=smem, size = 0x200, scoped, tag = 'input window, operand 1, single buffered']
    #allocation9 [shape = 'u8[512]{0}', space=smem, size = 0x200, scoped, tag = 'input window, operand 2, single buffered']
    #allocation10 [shape = 's32[1]{0}', space=sflag, size = 0x4, scoped, tag = 'scoped memory for tpu_custom_call.1']
    #allocation11 [shape = 'u8[512]{0}', space=smem, size = 0x200, scoped, tag = 'input window, operand 3, single buffered']
    #allocation12 [shape = 'u8[65536]{0}', space=vmem, size = 0x10000, scoped, tag = 'input window, operand 4, single buffered']
    #allocation13 [shape = 'u8[65536]{0}', space=vmem, size = 0x10000, scoped, tag = 'output window, operand 0, single buffered']
    %10 = vsyncpa [#allocation6], 0
    %11 = vsyncpa [#allocation7], 0
    %12 = vsyncpa [#allocation10], 0
    %13 = vsyncpa [#allocation4], 0
    %14 = vsyncpa [#allocation5], 0
    // Predicated region
    $region2: #{tpu_custom_call.1} parent=1 // pred_check
      _
    $region3: #{tpu_custom_call.1} parent=1 // pred_check_branch
      %16 = sbr.rel (0) target = $region5
    $region4: #{tpu_custom_call.1} parent=1 // pred_region
      %s18 = ssub.s32 16, 16
      %19 = vsyncadd [#allocation6], %s18
      %22 = dma.hbm_to_smem %s0, 16, [#allocation3], [#allocation6]
    $region5: #{tpu_custom_call.1} parent=1 // pred_fallthru
      _
    // Predicated region
    $region6: #{tpu_custom_call.1} parent=1 // pred_check
      _
    $region7: #{tpu_custom_call.1} parent=1 // pred_check_branch
      %24 = sbr.rel (0) target = $region9
    $region8: #{tpu_custom_call.1} parent=1 // pred_region
      %s26 = ssub.s32 16, 16
      %27 = vsyncadd [#allocation7], %s26
      %s29 = sshll.u32 %s1, 4
      %s30 = int_to_ptr.vmem [resolvable:$true] %s29
      %32 = dma.vmem_to_smem %s30, 16, [#allocation8], [#allocation7]
    $region9: #{tpu_custom_call.1} parent=1 // pred_fallthru
      _
    // Predicated region
    $region10: #{tpu_custom_call.1} parent=1 // pred_check
      _
    $region11: #{tpu_custom_call.1} parent=1 // pred_check_branch
      %34 = sbr.rel (0) target = $region13
    $region12: #{tpu_custom_call.1} parent=1 // pred_region
      %s36 = ssub.s32 16, 16
      %37 = vsyncadd [#allocation10], %s36
      %s39 = sshll.u32 %s2, 4
      %s40 = int_to_ptr.vmem [resolvable:$true] %s39
      %42 = dma.vmem_to_smem %s40, 16, [#allocation9], [#allocation10]
    $region13: #{tpu_custom_call.1} parent=1 // pred_fallthru
      _
    // Predicated region
    $region14: #{tpu_custom_call.1} parent=1 // pred_check
      _
    $region15: #{tpu_custom_call.1} parent=1 // pred_check_branch
      %44 = sbr.rel (0) target = $region17
    $region16: #{tpu_custom_call.1} parent=1 // pred_region
      %s46 = ssub.s32 16, 16
      %47 = vsyncadd [#allocation10], %s46
      %s49 = sshll.u32 %s3, 4
      %s50 = int_to_ptr.vmem [resolvable:$true] %s49
      %52 = dma.vmem_to_smem %s50, 16, [#allocation11], [#allocation10]
    $region17: #{tpu_custom_call.1} parent=1 // pred_fallthru
      _
    // Predicated region
    $region18: #{tpu_custom_call.1} parent=1 // pred_check
      _
    $region19: #{tpu_custom_call.1} parent=1 // pred_check_branch
      %54 = sbr.rel (0) target = $region21
    $region20: #{tpu_custom_call.1} parent=1 // pred_region
      %s56 = ssub.s32 2048, 2048
      %57 = vsyncadd [#allocation4], %s56
      %s58 = sshll.u32 [#allocation12], 4
      %s59 = int_to_ptr.vmem [resolvable:$true] %s58
      %64 = dma.hbm_to_vmem [thread:$0]  %s4, 2048, %s59, [#allocation4], 128, 128, 8
    $region21: #{tpu_custom_call.1} parent=1 // pred_fallthru
      _
    // Predicated region
    $region22: #{tpu_custom_call.1} parent=1 // pred_check
      _
    $region23: #{tpu_custom_call.1} parent=1 // pred_check_branch
      %66 = sbr.rel (0) target = $region25
    $region24: #{tpu_custom_call.1} parent=1 // pred_region
      %67 = dma.done [#allocation6], 16
    $region25: #{tpu_custom_call.1} parent=1 // pred_fallthru
      _
    // Predicated region
    $region26: #{tpu_custom_call.1} parent=1 // pred_check
      _
    $region27: #{tpu_custom_call.1} parent=1 // pred_check_branch
      %69 = sbr.rel (0) target = $region29
    $region28: #{tpu_custom_call.1} parent=1 // pred_region
      %70 = dma.done [#allocation7], 16
    $region29: #{tpu_custom_call.1} parent=1 // pred_fallthru
      _
    // Predicated region
    $region30: #{tpu_custom_call.1} parent=1 // pred_check
      _
    $region31: #{tpu_custom_call.1} parent=1 // pred_check_branch
      %72 = sbr.rel (0) target = $region33
    $region32: #{tpu_custom_call.1} parent=1 // pred_region
      %73 = dma.done [#allocation10], 16
    $region33: #{tpu_custom_call.1} parent=1 // pred_fallthru
      _
    // Predicated region
    $region34: #{tpu_custom_call.1} parent=1 // pred_check
      _
    $region35: #{tpu_custom_call.1} parent=1 // pred_check_branch
      %75 = sbr.rel (0) target = $region37
    $region36: #{tpu_custom_call.1} parent=1 // pred_region
      %76 = dma.done [#allocation10], 16
    $region37: #{tpu_custom_call.1} parent=1 // pred_fallthru
      _
    // Predicated region
    $region38: #{tpu_custom_call.1} parent=1 // pred_check
      _
    $region39: #{tpu_custom_call.1} parent=1 // pred_check_branch
      %78 = sbr.rel (0) target = $region41
    $region40: #{tpu_custom_call.1} parent=1 // pred_region
      %79 = dma.done [#allocation4], 2048
    $region41: #{tpu_custom_call.1} parent=1 // pred_fallthru
      _
    %80 = sfence
    %p81 = scmp.eq.s32.totalorder 0, 0
    // Predicated region
    $region42: #{tpu_custom_call.1} parent=1 // pred_check
      %p82 = pneg %p81
    $region43: #{tpu_custom_call.1} parent=1 // pred_check_branch
      %84 = sbr.rel (%p82) target = $region45
    $region44: #{tpu_custom_call.1} parent=1 // pred_region
      %85 = vst [vmem:[#allocation2] sm:$0xff] 0.0
    $region45: #{tpu_custom_call.1} parent=1 // pred_fallthru
      _
    %s86 = sld [smem:[#allocation3]]
    %s87 = sld [smem:[#allocation3 + $0x1]]
    %s88 = sld [smem:[#allocation3 + $0x2]]
    %s89 = sld [smem:[#allocation8]]
    %s90 = sld [smem:[#allocation8 + $0x1]]
    %s91 = sld [smem:[#allocation8 + $0x2]]
    %s92 = sld [smem:[#allocation9]]
    %s93 = sld [smem:[#allocation9 + $0x1]]
    %s94 = sld [smem:[#allocation9 + $0x2]]
    %s95 = sld [smem:[#allocation11]]
    %s96 = sld [smem:[#allocation11 + $0x1]]
    %s97 = sld [smem:[#allocation11 + $0x2]]
    %s98 = smul.f32 %s86, 0.5
    %s99 = sadd.f32 %s92, %s95
    %s100 = smul.f32 %s99, 0.5
    %s101 = smul.f32 %s89, 0.5
    %s102 = smul.f32 %s87, 0.5
    %s103 = sadd.f32 %s93, %s96
    %s104 = smul.f32 %s103, 0.5
    %s105 = smul.f32 %s90, 0.5
    %v106 = vld [vmem:[#allocation2] sm:$0xff]
    %s107 = smul.u32 0, 8
    %s108 = scalar_lea.vmem [#allocation12], %s107
    %v109 = vld [vmem:[%s108] sm:$0xff]
    %v110 = vld [vmem:[%s108 + $0x8] sm:$0xff]
    %v111 = vld [vmem:[%s108 + $0x10] sm:$0xff]
    %v112 = vld [vmem:[%s108 + $0x18] sm:$0xff]
    %v113 = vld [vmem:[%s108 + $0x20] sm:$0xff]
    %v114 = vld [vmem:[%s108 + $0x28] sm:$0xff]
    %v115 = vld [vmem:[%s108 + $0x30] sm:$0xff]
    %v116 = vld [vmem:[%s108 + $0x38] sm:$0xff]
    %v117 = vstv %s98
    %v118 = vmul.f32 %v109, %v117
    %v119 = vstv %s100
    %v120 = vadd.f32 %v118, %v119
    %v121 = vstv %s101
    %v122 = vmul.f32 %v106, %v121
    %v123 = vadd.f32 %v120, %v122
    %v124 = vtanh.pop %v123
    %v125 = vmul.f32 %v124, 0.5
    %v126 = vadd.f32 %v125, 0.5
    %v127 = vstv %s102
    %v128 = vmul.f32 %v109, %v127
    %v129 = vstv %s104
    %v130 = vadd.f32 %v128, %v129
    %v131 = vstv %s105
    %v132 = vmul.f32 %v106, %v131
    %v133 = vadd.f32 %v130, %v132
    %v134 = vtanh.pop %v133
    %v135 = vmul.f32 %v134, 0.5
    %v136 = vadd.f32 %v135, 0.5
    %v137 = vstv %s88
    %v138 = vmul.f32 %v109, %v137
    %v139 = vstv %s94
    %v140 = vadd.f32 %v138, %v139
    %v141 = vstv %s91
    %v142 = vmul.f32 %v106, %v141
    %v143 = vstv %s97
    %v144 = vadd.f32 %v142, %v143
    %v145 = vmul.f32 %v126, %v144
    %v146 = vadd.f32 %v140, %v145
    %v147 = vtanh.pop %v146
    %v148 = vsub.f32 %v106, %v147
    %v149 = vmul.f32 %v136, %v148
    %v150 = vadd.f32 %v147, %v149
    %s151 = scalar_lea.vmem [#allocation13], %s107
    %152 = vst [vmem:[%s151] sm:$0xff] %v150
    %v153 = vmul.f32 %v110, %v117
    %v154 = vadd.f32 %v153, %v119
    %v155 = vmul.f32 %v150, %v121
    %v156 = vadd.f32 %v154, %v155
    %v157 = vtanh.pop %v156
    %v158 = vmul.f32 %v157, 0.5
    %v159 = vadd.f32 %v158, 0.5
    %v160 = vmul.f32 %v110, %v127
    %v161 = vadd.f32 %v160, %v129
    %v162 = vmul.f32 %v150, %v131
    %v163 = vadd.f32 %v161, %v162
    %v164 = vtanh.pop %v163
    %v165 = vmul.f32 %v164, 0.5
    %v166 = vadd.f32 %v165, 0.5
    %v167 = vmul.f32 %v110, %v137
    %v168 = vadd.f32 %v167, %v139
    %v169 = vmul.f32 %v150, %v141
    %v170 = vadd.f32 %v169, %v143
    %v171 = vmul.f32 %v159, %v170
    %v172 = vadd.f32 %v168, %v171
    %v173 = vtanh.pop %v172
    %v174 = vsub.f32 %v150, %v173
    %v175 = vmul.f32 %v166, %v174
    %v176 = vadd.f32 %v173, %v175
    %s177 = sadd.s32 0, 1
    %s178 = smul.u32 %s177, 8
    %s179 = scalar_lea.vmem [#allocation13], %s178
    %180 = vst [vmem:[%s179] sm:$0xff] %v176
    %v181 = vmul.f32 %v111, %v117
    %v182 = vadd.f32 %v181, %v119
    %v183 = vmul.f32 %v176, %v121
    %v184 = vadd.f32 %v182, %v183
    %v185 = vtanh.pop %v184
    %v186 = vmul.f32 %v185, 0.5
    %v187 = vadd.f32 %v186, 0.5
    %v188 = vmul.f32 %v111, %v127
    %v189 = vadd.f32 %v188, %v129
    %v190 = vmul.f32 %v176, %v131
    %v191 = vadd.f32 %v189, %v190
    %v192 = vtanh.pop %v191
    %v193 = vmul.f32 %v192, 0.5
    %v194 = vadd.f32 %v193, 0.5
    %v195 = vmul.f32 %v111, %v137
    %v196 = vadd.f32 %v195, %v139
    %v197 = vmul.f32 %v176, %v141
    %v198 = vadd.f32 %v197, %v143
    %v199 = vmul.f32 %v187, %v198
    %v200 = vadd.f32 %v196, %v199
    %v201 = vtanh.pop %v200
    %v202 = vsub.f32 %v176, %v201
    %v203 = vmul.f32 %v194, %v202
    %v204 = vadd.f32 %v201, %v203
    %s205 = sadd.s32 0, 2
    %s206 = smul.u32 %s205, 8
    %s207 = scalar_lea.vmem [#allocation13], %s206
    %208 = vst [vmem:[%s207] sm:$0xff] %v204
    %v209 = vmul.f32 %v112, %v117
    %v210 = vadd.f32 %v209, %v119
    %v211 = vmul.f32 %v204, %v121
    %v212 = vadd.f32 %v210, %v211
    %v213 = vtanh.pop %v212
    %v214 = vmul.f32 %v213, 0.5
    %v215 = vadd.f32 %v214, 0.5
    %v216 = vmul.f32 %v112, %v127
    %v217 = vadd.f32 %v216, %v129
    %v218 = vmul.f32 %v204, %v131
    %v219 = vadd.f32 %v217, %v218
    %v220 = vtanh.pop %v219
    %v221 = vmul.f32 %v220, 0.5
    %v222 = vadd.f32 %v221, 0.5
    %v223 = vmul.f32 %v112, %v137
    %v224 = vadd.f32 %v223, %v139
    %v225 = vmul.f32 %v204, %v141
    %v226 = vadd.f32 %v225, %v143
    %v227 = vmul.f32 %v215, %v226
    %v228 = vadd.f32 %v224, %v227
    %v229 = vtanh.pop %v228
    %v230 = vsub.f32 %v204, %v229
    %v231 = vmul.f32 %v222, %v230
    %v232 = vadd.f32 %v229, %v231
    %s233 = sadd.s32 0, 3
    %s234 = smul.u32 %s233, 8
    %s235 = scalar_lea.vmem [#allocation13], %s234
    %236 = vst [vmem:[%s235] sm:$0xff] %v232
    %v237 = vmul.f32 %v113, %v117
    %v238 = vadd.f32 %v237, %v119
    %v239 = vmul.f32 %v232, %v121
    %v240 = vadd.f32 %v238, %v239
    %v241 = vtanh.pop %v240
    %v242 = vmul.f32 %v241, 0.5
    %v243 = vadd.f32 %v242, 0.5
    %v244 = vmul.f32 %v113, %v127
    %v245 = vadd.f32 %v244, %v129
    %v246 = vmul.f32 %v232, %v131
    %v247 = vadd.f32 %v245, %v246
    %v248 = vtanh.pop %v247
    %v249 = vmul.f32 %v248, 0.5
    %v250 = vadd.f32 %v249, 0.5
    %v251 = vmul.f32 %v113, %v137
    %v252 = vadd.f32 %v251, %v139
    %v253 = vmul.f32 %v232, %v141
    %v254 = vadd.f32 %v253, %v143
    %v255 = vmul.f32 %v243, %v254
    %v256 = vadd.f32 %v252, %v255
    %v257 = vtanh.pop %v256
    %v258 = vsub.f32 %v232, %v257
    %v259 = vmul.f32 %v250, %v258
    %v260 = vadd.f32 %v257, %v259
    %s261 = sadd.s32 0, 4
    %s262 = smul.u32 %s261, 8
    %s263 = scalar_lea.vmem [#allocation13], %s262
    %264 = vst [vmem:[%s263] sm:$0xff] %v260
    %v265 = vmul.f32 %v114, %v117
    %v266 = vadd.f32 %v265, %v119
    %v267 = vmul.f32 %v260, %v121
    %v268 = vadd.f32 %v266, %v267
    %v269 = vtanh.pop %v268
    %v270 = vmul.f32 %v269, 0.5
    %v271 = vadd.f32 %v270, 0.5
    %v272 = vmul.f32 %v114, %v127
    %v273 = vadd.f32 %v272, %v129
    %v274 = vmul.f32 %v260, %v131
    %v275 = vadd.f32 %v273, %v274
    %v276 = vtanh.pop %v275
    %v277 = vmul.f32 %v276, 0.5
    %v278 = vadd.f32 %v277, 0.5
    %v279 = vmul.f32 %v114, %v137
    %v280 = vadd.f32 %v279, %v139
    %v281 = vmul.f32 %v260, %v141
    %v282 = vadd.f32 %v281, %v143
    %v283 = vmul.f32 %v271, %v282
    %v284 = vadd.f32 %v280, %v283
    %v285 = vtanh.pop %v284
    %v286 = vsub.f32 %v260, %v285
    %v287 = vmul.f32 %v278, %v286
    %v288 = vadd.f32 %v285, %v287
    %s289 = sadd.s32 0, 5
    %s290 = smul.u32 %s289, 8
    %s291 = scalar_lea.vmem [#allocation13], %s290
    %292 = vst [vmem:[%s291] sm:$0xff] %v288
    %v293 = vmul.f32 %v115, %v117
    %v294 = vadd.f32 %v293, %v119
    %v295 = vmul.f32 %v288, %v121
    %v296 = vadd.f32 %v294, %v295
    %v297 = vtanh.pop %v296
    %v298 = vmul.f32 %v297, 0.5
    %v299 = vadd.f32 %v298, 0.5
    %v300 = vmul.f32 %v115, %v127
    %v301 = vadd.f32 %v300, %v129
    %v302 = vmul.f32 %v288, %v131
    %v303 = vadd.f32 %v301, %v302
    %v304 = vtanh.pop %v303
    %v305 = vmul.f32 %v304, 0.5
    %v306 = vadd.f32 %v305, 0.5
    %v307 = vmul.f32 %v115, %v137
    %v308 = vadd.f32 %v307, %v139
    %v309 = vmul.f32 %v288, %v141
    %v310 = vadd.f32 %v309, %v143
    %v311 = vmul.f32 %v299, %v310
    %v312 = vadd.f32 %v308, %v311
    %v313 = vtanh.pop %v312
    %v314 = vsub.f32 %v288, %v313
    %v315 = vmul.f32 %v306, %v314
    %v316 = vadd.f32 %v313, %v315
    %s317 = sadd.s32 0, 6
    %s318 = smul.u32 %s317, 8
    %s319 = scalar_lea.vmem [#allocation13], %s318
    %320 = vst [vmem:[%s319] sm:$0xff] %v316
    %v321 = vmul.f32 %v116, %v117
    %v322 = vadd.f32 %v321, %v119
    %v323 = vmul.f32 %v316, %v121
    %v324 = vadd.f32 %v322, %v323
    %v325 = vtanh.pop %v324
    %v326 = vmul.f32 %v325, 0.5
    %v327 = vadd.f32 %v326, 0.5
    %v328 = vmul.f32 %v116, %v127
    %v329 = vadd.f32 %v328, %v129
    %v330 = vmul.f32 %v316, %v131
    %v331 = vadd.f32 %v329, %v330
    %v332 = vtanh.pop %v331
    %v333 = vmul.f32 %v332, 0.5
    %v334 = vadd.f32 %v333, 0.5
    %v335 = vmul.f32 %v116, %v137
    %v336 = vadd.f32 %v335, %v139
    %v337 = vmul.f32 %v316, %v141
    %v338 = vadd.f32 %v337, %v143
    %v339 = vmul.f32 %v327, %v338
    %v340 = vadd.f32 %v336, %v339
    %v341 = vtanh.pop %v340
    %v342 = vsub.f32 %v316, %v341
    %v343 = vmul.f32 %v334, %v342
    %v344 = vadd.f32 %v341, %v343
    %s345 = sadd.s32 0, 7
    %s346 = smul.u32 %s345, 8
    %s347 = scalar_lea.vmem [#allocation13], %s346
    %348 = vst [vmem:[%s347] sm:$0xff] %v344
    %s349 = smul.u32 8, 8
    %s350 = scalar_lea.vmem [#allocation12], %s349
    %v351 = vld [vmem:[%s350] sm:$0xff]
    %v352 = vld [vmem:[%s350 + $0x8] sm:$0xff]
    %v353 = vld [vmem:[%s350 + $0x10] sm:$0xff]
    %v354 = vld [vmem:[%s350 + $0x18] sm:$0xff]
    %v355 = vld [vmem:[%s350 + $0x20] sm:$0xff]
    %v356 = vld [vmem:[%s350 + $0x28] sm:$0xff]
    %v357 = vld [vmem:[%s350 + $0x30] sm:$0xff]
    %v358 = vld [vmem:[%s350 + $0x38] sm:$0xff]
    %v359 = vmul.f32 %v351, %v117
    %v360 = vadd.f32 %v359, %v119
    %v361 = vmul.f32 %v344, %v121
    %v362 = vadd.f32 %v360, %v361
    %v363 = vtanh.pop %v362
    %v364 = vmul.f32 %v363, 0.5
    %v365 = vadd.f32 %v364, 0.5
    %v366 = vmul.f32 %v351, %v127
    %v367 = vadd.f32 %v366, %v129
    %v368 = vmul.f32 %v344, %v131
    %v369 = vadd.f32 %v367, %v368
    %v370 = vtanh.pop %v369
    %v371 = vmul.f32 %v370, 0.5
    %v372 = vadd.f32 %v371, 0.5
    %v373 = vmul.f32 %v351, %v137
    %v374 = vadd.f32 %v373, %v139
    %v375 = vmul.f32 %v344, %v141
    %v376 = vadd.f32 %v375, %v143
    %v377 = vmul.f32 %v365, %v376
    %v378 = vadd.f32 %v374, %v377
    %v379 = vtanh.pop %v378
    %v380 = vsub.f32 %v344, %v379
    %v381 = vmul.f32 %v372, %v380
    %v382 = vadd.f32 %v379, %v381
    %s383 = scalar_lea.vmem [#allocation13], %s349
    %384 = vst [vmem:[%s383] sm:$0xff] %v382
    %v385 = vmul.f32 %v352, %v117
    %v386 = vadd.f32 %v385, %v119
    %v387 = vmul.f32 %v382, %v121
    %v388 = vadd.f32 %v386, %v387
    %v389 = vtanh.pop %v388
    %v390 = vmul.f32 %v389, 0.5
    %v391 = vadd.f32 %v390, 0.5
    %v392 = vmul.f32 %v352, %v127
    %v393 = vadd.f32 %v392, %v129
    %v394 = vmul.f32 %v382, %v131
    %v395 = vadd.f32 %v393, %v394
    %v396 = vtanh.pop %v395
    %v397 = vmul.f32 %v396, 0.5
    %v398 = vadd.f32 %v397, 0.5
    %v399 = vmul.f32 %v352, %v137
    %v400 = vadd.f32 %v399, %v139
    %v401 = vmul.f32 %v382, %v141
    %v402 = vadd.f32 %v401, %v143
    %v403 = vmul.f32 %v391, %v402
    %v404 = vadd.f32 %v400, %v403
    %v405 = vtanh.pop %v404
    %v406 = vsub.f32 %v382, %v405
    %v407 = vmul.f32 %v398, %v406
    %v408 = vadd.f32 %v405, %v407
    %s409 = sadd.s32 8, 1
    %s410 = smul.u32 %s409, 8
    %s411 = scalar_lea.vmem [#allocation13], %s410
    %412 = vst [vmem:[%s411] sm:$0xff] %v408
    %v413 = vmul.f32 %v353, %v117
    %v414 = vadd.f32 %v413, %v119
    %v415 = vmul.f32 %v408, %v121
    %v416 = vadd.f32 %v414, %v415
    %v417 = vtanh.pop %v416
    %v418 = vmul.f32 %v417, 0.5
    %v419 = vadd.f32 %v418, 0.5
    %v420 = vmul.f32 %v353, %v127
    %v421 = vadd.f32 %v420, %v129
    %v422 = vmul.f32 %v408, %v131
    %v423 = vadd.f32 %v421, %v422
    %v424 = vtanh.pop %v423
    %v425 = vmul.f32 %v424, 0.5
    %v426 = vadd.f32 %v425, 0.5
    %v427 = vmul.f32 %v353, %v137
    %v428 = vadd.f32 %v427, %v139
    %v429 = vmul.f32 %v408, %v141
    %v430 = vadd.f32 %v429, %v143
    %v431 = vmul.f32 %v419, %v430
    %v432 = vadd.f32 %v428, %v431
    %v433 = vtanh.pop %v432
    %v434 = vsub.f32 %v408, %v433
    %v435 = vmul.f32 %v426, %v434
    %v436 = vadd.f32 %v433, %v435
    %s437 = sadd.s32 8, 2
    %s438 = smul.u32 %s437, 8
    %s439 = scalar_lea.vmem [#allocation13], %s438
    %440 = vst [vmem:[%s439] sm:$0xff] %v436
    %v441 = vmul.f32 %v354, %v117
    %v442 = vadd.f32 %v441, %v119
    %v443 = vmul.f32 %v436, %v121
    %v444 = vadd.f32 %v442, %v443
    %v445 = vtanh.pop %v444
    %v446 = vmul.f32 %v445, 0.5
    %v447 = vadd.f32 %v446, 0.5
    %v448 = vmul.f32 %v354, %v127
    %v449 = vadd.f32 %v448, %v129
    %v450 = vmul.f32 %v436, %v131
    %v451 = vadd.f32 %v449, %v450
    %v452 = vtanh.pop %v451
    %v453 = vmul.f32 %v452, 0.5
    %v454 = vadd.f32 %v453, 0.5
    %v455 = vmul.f32 %v354, %v137
    %v456 = vadd.f32 %v455, %v139
    %v457 = vmul.f32 %v436, %v141
    %v458 = vadd.f32 %v457, %v143
    %v459 = vmul.f32 %v447, %v458
    %v460 = vadd.f32 %v456, %v459
    %v461 = vtanh.pop %v460
    %v462 = vsub.f32 %v436, %v461
    %v463 = vmul.f32 %v454, %v462
    %v464 = vadd.f32 %v461, %v463
    %s465 = sadd.s32 8, 3
    %s466 = smul.u32 %s465, 8
    %s467 = scalar_lea.vmem [#allocation13], %s466
    %468 = vst [vmem:[%s467] sm:$0xff] %v464
    %v469 = vmul.f32 %v355, %v117
    %v470 = vadd.f32 %v469, %v119
    %v471 = vmul.f32 %v464, %v121
    %v472 = vadd.f32 %v470, %v471
    %v473 = vtanh.pop %v472
    %v474 = vmul.f32 %v473, 0.5
    %v475 = vadd.f32 %v474, 0.5
    %v476 = vmul.f32 %v355, %v127
    %v477 = vadd.f32 %v476, %v129
    %v478 = vmul.f32 %v464, %v131
    %v479 = vadd.f32 %v477, %v478
    %v480 = vtanh.pop %v479
    %v481 = vmul.f32 %v480, 0.5
    %v482 = vadd.f32 %v481, 0.5
    %v483 = vmul.f32 %v355, %v137
    %v484 = vadd.f32 %v483, %v139
    %v485 = vmul.f32 %v464, %v141
    %v486 = vadd.f32 %v485, %v143
    %v487 = vmul.f32 %v475, %v486
    %v488 = vadd.f32 %v484, %v487
    %v489 = vtanh.pop %v488
    %v490 = vsub.f32 %v464, %v489
    %v491 = vmul.f32 %v482, %v490
    %v492 = vadd.f32 %v489, %v491
    %s493 = sadd.s32 8, 4
    %s494 = smul.u32 %s493, 8
    %s495 = scalar_lea.vmem [#allocation13], %s494
    %496 = vst [vmem:[%s495] sm:$0xff] %v492
    %v497 = vmul.f32 %v356, %v117
    %v498 = vadd.f32 %v497, %v119
    %v499 = vmul.f32 %v492, %v121
    %v500 = vadd.f32 %v498, %v499
    %v501 = vtanh.pop %v500
    %v502 = vmul.f32 %v501, 0.5
    %v503 = vadd.f32 %v502, 0.5
    %v504 = vmul.f32 %v356, %v127
    %v505 = vadd.f32 %v504, %v129
    %v506 = vmul.f32 %v492, %v131
    %v507 = vadd.f32 %v505, %v506
    %v508 = vtanh.pop %v507
    %v509 = vmul.f32 %v508, 0.5
    %v510 = vadd.f32 %v509, 0.5
    %v511 = vmul.f32 %v356, %v137
    %v512 = vadd.f32 %v511, %v139
    %v513 = vmul.f32 %v492, %v141
    %v514 = vadd.f32 %v513, %v143
    %v515 = vmul.f32 %v503, %v514
    %v516 = vadd.f32 %v512, %v515
    %v517 = vtanh.pop %v516
    %v518 = vsub.f32 %v492, %v517
    %v519 = vmul.f32 %v510, %v518
    %v520 = vadd.f32 %v517, %v519
    %s521 = sadd.s32 8, 5
    %s522 = smul.u32 %s521, 8
    %s523 = scalar_lea.vmem [#allocation13], %s522
    %524 = vst [vmem:[%s523] sm:$0xff] %v520
    %v525 = vmul.f32 %v357, %v117
    %v526 = vadd.f32 %v525, %v119
    %v527 = vmul.f32 %v520, %v121
    %v528 = vadd.f32 %v526, %v527
    %v529 = vtanh.pop %v528
    %v530 = vmul.f32 %v529, 0.5
    %v531 = vadd.f32 %v530, 0.5
    %v532 = vmul.f32 %v357, %v127
    %v533 = vadd.f32 %v532, %v129
    %v534 = vmul.f32 %v520, %v131
    %v535 = vadd.f32 %v533, %v534
    %v536 = vtanh.pop %v535
    %v537 = vmul.f32 %v536, 0.5
    %v538 = vadd.f32 %v537, 0.5
    %v539 = vmul.f32 %v357, %v137
    %v540 = vadd.f32 %v539, %v139
    %v541 = vmul.f32 %v520, %v141
    %v542 = vadd.f32 %v541, %v143
    %v543 = vmul.f32 %v531, %v542
    %v544 = vadd.f32 %v540, %v543
    %v545 = vtanh.pop %v544
    %v546 = vsub.f32 %v520, %v545
    %v547 = vmul.f32 %v538, %v546
    %v548 = vadd.f32 %v545, %v547
    %s549 = sadd.s32 8, 6
    %s550 = smul.u32 %s549, 8
    %s551 = scalar_lea.vmem [#allocation13], %s550
    %552 = vst [vmem:[%s551] sm:$0xff] %v548
    %v553 = vmul.f32 %v358, %v117
    %v554 = vadd.f32 %v553, %v119
    %v555 = vmul.f32 %v548, %v121
    %v556 = vadd.f32 %v554, %v555
    %v557 = vtanh.pop %v556
    %v558 = vmul.f32 %v557, 0.5
    %v559 = vadd.f32 %v558, 0.5
    %v560 = vmul.f32 %v358, %v127
    %v561 = vadd.f32 %v560, %v129
    %v562 = vmul.f32 %v548, %v131
    %v563 = vadd.f32 %v561, %v562
    %v564 = vtanh.pop %v563
    %v565 = vmul.f32 %v564, 0.5
    %v566 = vadd.f32 %v565, 0.5
    %v567 = vmul.f32 %v358, %v137
    %v568 = vadd.f32 %v567, %v139
    %v569 = vmul.f32 %v548, %v141
    %v570 = vadd.f32 %v569, %v143
    %v571 = vmul.f32 %v559, %v570
    %v572 = vadd.f32 %v568, %v571
    %v573 = vtanh.pop %v572
    %v574 = vsub.f32 %v548, %v573
    %v575 = vmul.f32 %v566, %v574
    %v576 = vadd.f32 %v573, %v575
    %s577 = sadd.s32 8, 7
    %s578 = smul.u32 %s577, 8
    %s579 = scalar_lea.vmem [#allocation13], %s578
    %580 = vst [vmem:[%s579] sm:$0xff] %v576
    %581 = vst [vmem:[#allocation2] sm:$0xff] %v576
    // Predicated region
    $region46: #{tpu_custom_call.1} parent=1 // pred_check
      _
    $region47: #{tpu_custom_call.1} parent=1 // pred_check_branch
      %583 = sbr.rel (0) target = $region49
    $region48: #{tpu_custom_call.1} parent=1 // pred_region
      %s585 = ssub.s32 2048, 2048
      %586 = vsyncadd [#allocation5], %s585
      %s587 = sshll.u32 [#allocation13], 4
      %s588 = int_to_ptr.vmem [resolvable:$true] %s587
      %593 = dma.vmem_to_hbm [thread:$0]  %s588, 2048, %s5, [#allocation5], 128, 128, 8
    $region49: #{tpu_custom_call.1} parent=1 // pred_fallthru
      _
    // Predicated region
    $region50: #{tpu_custom_call.1} parent=1 // pred_check
      _
    $region51: #{tpu_custom_call.1} parent=1 // pred_check_branch
      %595 = sbr.rel (0) target = $region53
    $region52: #{tpu_custom_call.1} parent=1 // pred_region
      %596 = dma.done [#allocation5], 2048
    $region53: #{tpu_custom_call.1} parent=1 // pred_fallthru
      _
    %597 = vsyncpa [#allocation4], 1
    %598 = vsyncpa [#allocation5], 1
    %599 = vsyncpa [#allocation6], 1
    %600 = vsyncpa [#allocation7], 1
    %601 = vsyncpa [#allocation10], 1

</llo_original>
